<compile_context>
chip_gen: v5e
topology: v5e:2x2
jax: 0.10.0
libtpu: 0.0.40
codegen_flags: <defaults>
</compile_context>

<pallas_src>
import functools

import jax
import jax.numpy as jnp
from jax.experimental import pallas as pl
from jax.experimental.pallas import tpu as pltpu


def _round_up(x: int, m: int) -> int:
    return ((x + m - 1) // m) * m


def _pairwise_diff_loss_kernel(s_row_ref, r_row_ref, s_col_ref, r_col_ref,
                               sum_ref, cnt_ref, acc_c_ref, acc_w_ref,
                               *, temperature, L, TI, TJ):
    i = pl.program_id(1)                 # row-tile index
    j = pl.program_id(2)                 # col-tile index (reduction axis, innermost)
    nj = pl.num_programs(2)

    @pl.when(j == 0)
    def _init():
        acc_c_ref[...] = jnp.zeros_like(acc_c_ref)
        acc_w_ref[...] = jnp.zeros_like(acc_w_ref)

    r_row = r_row_ref[...]               # (TB, TI) f32
    r_col = r_col_ref[...]               # (TB, TJ) f32
    s_col = s_col_ref[...]               # (TB, TJ) f32

    # Mask padded list positions: padded rows -> -inf, padded cols -> +inf, so
    # the ">" comparison can never select a phantom pair.
    row_ids = jax.lax.broadcasted_iota(jnp.int32, (1, TI), 1) + i * TI
    col_ids = jax.lax.broadcasted_iota(jnp.int32, (1, TJ), 1) + j * TJ
    r_row = jnp.where(row_ids < L, r_row, -jnp.inf)
    r_col = jnp.where(col_ids < L, r_col, jnp.inf)

    # The only pairwise tensor formed: (TB, TI, TJ) 0/1 relevance comparison.
    # VPU compare + multiply, XLU lane-axis (TJ) reductions; MXU not used.
    mask_f = (r_row[:, :, None] > r_col[:, None, :]).astype(jnp.float32)
    c = jnp.sum(mask_f, axis=-1)                              # (TB, TI) pair counts
    w = jnp.sum(mask_f * s_col[:, None, :], axis=-1)          # (TB, TI) sum_q mask*s_q
    acc_c_ref[...] += c
    acc_w_ref[...] += w

    @pl.when(j == nj - 1)
    def _finalize():
        c_tot = acc_c_ref[...]           # (TB, TI)
        w_tot = acc_w_ref[...]           # (TB, TI)
        s_row = s_row_ref[...]           # (TB, TI)
        cnt_ref[...] = c_tot[None, None]
        sum_ref[...] = (c_tot - temperature * (s_row * c_tot - w_tot))[None, None]


def pairwise_diff_loss(scores, relevance, *, temperature=1.0, margin=None,
                       softmax_outputs=False):
    if margin is not None:
        raise NotImplementedError(
            "Yet to implement margins for pairwise logistic loss.")
    if scores.shape != relevance.shape:
        raise ValueError("scores and relevance must have the same shape.")

    L = scores.shape[-1]
    s = jnp.asarray(scores, jnp.float32).reshape(-1, L)
    r = jnp.asarray(relevance, jnp.float32).reshape(-1, L)
    if softmax_outputs:
        # Hoisted: softmax needs the full row; one tiny XLA op on (B, L).
        s = jax.nn.softmax(s, axis=-1)
    B = s.shape[0]

    # --- Tile selection ----------------------------------------------------
    # Pad L only to a multiple of 128 and pick the largest tile in {256, 128}
    # that divides it (minimizes quadratic padding waste for awkward L).
    L_pad = _round_up(L, 128)
    T = 256 if L_pad % 256 == 0 else 128
    TI = TJ = T
    NI = L_pad // T

    # Size TB so the (TB, TI, TJ) f32 mask temp is ~8 MiB per grid step
    # (amortizes per-step overhead; fits comfortably on v5e/v6e/v7x).
    MASK_BUDGET = 8 * 1024 * 1024
    TB_cap = max(8, min(64, (MASK_BUDGET // (T * T * 4)) // 8 * 8))
    B_pad8 = _round_up(B, 8)
    TB = min(TB_cap, B_pad8)
    # If the whole problem is a single (i, j) tile, keep >= 2 batch tiles so
    # the "parallel" grid axes can be split across v7x's two TensorCores.
    if NI == 1 and B_pad8 == TB and B_pad8 >= 16:
        TB = max(8, _round_up(B_pad8 // 2, 8))
    B_pad = _round_up(B, TB)
    NB = B_pad // TB

    # Zero padding: padded batch rows have constant relevance -> never form
    # pairs; padded list positions are masked inside the kernel via iota.
    s_p = jnp.pad(s, ((0, B_pad - B), (0, L_pad - L)))
    r_p = jnp.pad(r, ((0, B_pad - B), (0, L_pad - L)))

    # VMEM budget derived from the actual tiles (mask temp + elementwise temps,
    # double-buffered blocks, scratch) with headroom; capped below v7x's 64 MiB.
    mask_bytes = TB * T * T * 4
    tile_bytes = TB * T * 4
    vmem_limit = min(56 * 1024 * 1024, 4 * mask_bytes + 24 * tile_bytes + (8 << 20))

    kernel = functools.partial(
        _pairwise_diff_loss_kernel,
        temperature=float(temperature), L=L, TI=TI, TJ=TJ)

    # TODO(synk): for the single-tile (NI==NJ==1) case the row/col views could
    # share one input block each, halving input DMA traffic (minor win).
    sum_p, cnt_p = pl.pallas_call(
        kernel,
        grid=(NB, NI, NI),
        in_specs=[
            pl.BlockSpec((TB, TI), lambda b, i, j: (b, i)),   # scores, row tile
            pl.BlockSpec((TB, TI), lambda b, i, j: (b, i)),   # relevance, row tile
            pl.BlockSpec((TB, TJ), lambda b, i, j: (b, j)),   # scores, col tile
            pl.BlockSpec((TB, TJ), lambda b, i, j: (b, j)),   # relevance, col tile
        ],
        out_specs=(
            pl.BlockSpec((1, 1, TB, TI), lambda b, i, j: (b, i, 0, 0)),
            pl.BlockSpec((1, 1, TB, TI), lambda b, i, j: (b, i, 0, 0)),
        ),
        out_shape=(
            jax.ShapeDtypeStruct((NB, NI, TB, TI), jnp.float32),  # partial sums
            jax.ShapeDtypeStruct((NB, NI, TB, TI), jnp.float32),  # partial counts
        ),
        scratch_shapes=[pltpu.VMEM((TB, TI), jnp.float32),        # acc: counts
                        pltpu.VMEM((TB, TI), jnp.float32)],       # acc: sum_q mask*s_q
        compiler_params=pltpu.CompilerParams(
            dimension_semantics=("parallel", "parallel", "arbitrary"),
            vmem_limit_bytes=int(vmem_limit)),
    )(s_p, r_p, s_p, r_p)

    # Tiny final reduction in the wrapper: exact int32 count, f32 sum.
    total_cnt = jnp.sum(cnt_p.astype(jnp.int32))
    total_sum = jnp.sum(sum_p)
    # 0/0 -> NaN matches torch.mean over an empty selection.
    return total_sum / total_cnt.astype(jnp.float32)


def _reference(scores, relevance, temperature=1.0, softmax_outputs=False):
    s = scores.astype(jnp.float32)
    if softmax_outputs:
        s = jax.nn.softmax(s, axis=-1)
    r = relevance.astype(jnp.float32)
    score_diff = s[..., :, None] - s[..., None, :]
    rel_diff = r[..., :, None] - r[..., None, :]
    loss = 1.0 - temperature * score_diff
    mask = rel_diff > 0
    return jnp.sum(jnp.where(mask, loss, 0.0)) / jnp.sum(mask)


if __name__ == "__main__":
    key = jax.random.PRNGKey(0)
    k_s, k_r, k_s2, k_r2, k_s3, k_r3 = jax.random.split(key, 6)

    # Small shapes consistent with the module: batch=2 queries, list length 8.
    B, L = 2, 8
    scores = jax.random.normal(k_s, (B, L), dtype=jnp.float32)
    relevance = jax.random.randint(k_r, (B, L), 0, 4).astype(jnp.float32)

    out = pairwise_diff_loss(scores, relevance, temperature=1.0, margin=None,
                             softmax_outputs=False)
    out = jax.block_until_ready(out)
    ref = _reference(scores, relevance)
    assert jnp.allclose(out, ref, rtol=1e-4, atol=1e-4), (out, ref)

    # Exercise the (hoisted) softmax path and a non-unit temperature.
    out_sm = pairwise_diff_loss(scores, relevance, temperature=2.0,
                                softmax_outputs=True)
    out_sm = jax.block_until_ready(out_sm)
    ref_sm = _reference(scores, relevance, temperature=2.0, softmax_outputs=True)
    assert jnp.allclose(out_sm, ref_sm, rtol=1e-4, atol=1e-4), (out_sm, ref_sm)

    # Multi-tile case: exercises L padding to 384 (not 512), masks and grid accumulation.
    B2, L2 = 3, 300
    scores2 = jax.random.normal(k_s2, (B2, L2), dtype=jnp.float32)
    relevance2 = jax.random.randint(k_r2, (B2, L2), 0, 5).astype(jnp.float32)
    out2 = pairwise_diff_loss(scores2, relevance2, temperature=0.5)
    out2 = jax.block_until_ready(out2)
    ref2 = _reference(scores2, relevance2, temperature=0.5)
    assert jnp.allclose(out2, ref2, rtol=1e-4, atol=1e-4), (out2, ref2)

    # Larger batch, single (i, j) tile: exercises batch-tile splitting (NB >= 2).
    B3, L3 = 40, 200
    scores3 = jax.random.normal(k_s3, (B3, L3), dtype=jnp.float32)
    relevance3 = jax.random.randint(k_r3, (B3, L3), 0, 3).astype(jnp.float32)
    out3 = pairwise_diff_loss(scores3, relevance3, temperature=1.5)
    out3 = jax.block_until_ready(out3)
    ref3 = _reference(scores3, relevance3, temperature=1.5)
    assert jnp.allclose(out3, ref3, rtol=1e-4, atol=1e-4), (out3, ref3)

    print("KERNEL_OK")
</pallas_src>

<mosaic_0001>
module attributes {stable_mosaic.version = 11 : i64} {
  func.func @_pairwise_diff_loss_kernel(%arg0: i32, %arg1: i32, %arg2: i32, %arg3: memref<8x128xf32, #tpu.memory_space<vmem>>, %arg4: memref<8x128xf32, #tpu.memory_space<vmem>>, %arg5: memref<8x128xf32, #tpu.memory_space<vmem>>, %arg6: memref<8x128xf32, #tpu.memory_space<vmem>>, %arg7: memref<1x1x8x128xf32, #tpu.memory_space<vmem>>, %arg8: memref<1x1x8x128xf32, #tpu.memory_space<vmem>>, %arg9: memref<8x128xf32, #tpu.memory_space<vmem>>, %arg10: memref<8x128xf32, #tpu.memory_space<vmem>>) attributes {dimension_semantics = [#tpu.dimension_semantics<parallel>, #tpu.dimension_semantics<parallel>, #tpu.dimension_semantics<arbitrary>], iteration_bounds = array<i64: 1, 1, 1>, scalar_prefetch = 0 : i64, scratch_operands = 2 : i64, tpu.core_type = #tpu.core_type<tc>, window_params = [{transform_indices = @transform_0, window_bounds = array<i64: 8, 128>}, {transform_indices = @transform_1, window_bounds = array<i64: 8, 128>}, {transform_indices = @transform_2, window_bounds = array<i64: 8, 128>}, {transform_indices = @transform_3, window_bounds = array<i64: 8, 128>}, {transform_indices = @transform_4, window_bounds = array<i64: 1, 1, 8, 128>}, {transform_indices = @transform_5, window_bounds = array<i64: 1, 1, 8, 128>}]} {
    %c0_i32 = arith.constant 0 : i32
    %0 = arith.cmpi eq, %arg2, %c0_i32 : i32
    %1 = arith.extui %0 : i1 to i32
    %c0_i32_0 = arith.constant 0 : i32
    %2 = arith.cmpi ne, %1, %c0_i32_0 : i32
    scf.if %2 {
      %cst_21 = arith.constant 0.000000e+00 : f32
      %47 = vector.broadcast %cst_21 : f32 to vector<8x128xf32>
      %c0_22 = arith.constant 0 : index
      %c0_23 = arith.constant 0 : index
      %48 = vector.load %arg9[%c0_22, %c0_23] : memref<8x128xf32, #tpu.memory_space<vmem>>, vector<8x128xf32>
      tpu.vector_store %arg9[%c0_22, %c0_23], %47 {strides = array<i32>} : memref<8x128xf32, #tpu.memory_space<vmem>>, vector<8x128xf32>,
      %cst_24 = arith.constant 0.000000e+00 : f32
      %49 = vector.broadcast %cst_24 : f32 to vector<8x128xf32>
      %c0_25 = arith.constant 0 : index
      %c0_26 = arith.constant 0 : index
      %50 = vector.load %arg10[%c0_25, %c0_26] : memref<8x128xf32, #tpu.memory_space<vmem>>, vector<8x128xf32>
      tpu.vector_store %arg10[%c0_25, %c0_26], %49 {strides = array<i32>} : memref<8x128xf32, #tpu.memory_space<vmem>>, vector<8x128xf32>,
    } else {
    }
    %c0 = arith.constant 0 : index
    %c0_1 = arith.constant 0 : index
    %3 = vector.load %arg4[%c0, %c0_1] : memref<8x128xf32, #tpu.memory_space<vmem>>, vector<8x128xf32>
    %c0_2 = arith.constant 0 : index
    %c0_3 = arith.constant 0 : index
    %4 = vector.load %arg6[%c0_2, %c0_3] : memref<8x128xf32, #tpu.memory_space<vmem>>, vector<8x128xf32>
    %c0_4 = arith.constant 0 : index
    %c0_5 = arith.constant 0 : index
    %5 = vector.load %arg5[%c0_4, %c0_5] : memref<8x128xf32, #tpu.memory_space<vmem>>, vector<8x128xf32>
    %6 = tpu.iota {dimensions = array<i32: 1>} : vector<1x128xi32>
    %c128_i32 = arith.constant 128 : i32
    %7 = arith.muli %arg1, %c128_i32 : i32
    %8 = vector.broadcast %7 : i32 to vector<1x128xi32>
    %9 = arith.addi %6, %8 : vector<1x128xi32>
    %10 = tpu.iota {dimensions = array<i32: 1>} : vector<1x128xi32>
    %c128_i32_6 = arith.constant 128 : i32
    %11 = arith.muli %arg2, %c128_i32_6 : i32
    %12 = vector.broadcast %11 : i32 to vector<1x128xi32>
    %13 = arith.addi %10, %12 : vector<1x128xi32>
    %c8_i32 = arith.constant 8 : i32
    %14 = vector.broadcast %c8_i32 : i32 to vector<1x128xi32>
    %15 = arith.cmpi slt, %9, %14 : vector<1x128xi32>
    %cst = arith.constant 0xFF800000 : f32
    %16 = vector.shape_cast %15 : vector<1x128xi1> to vector<1x128xi1>
    %17 = vector.broadcast %16 : vector<1x128xi1> to vector<8x128xi1>
    %18 = vector.broadcast %cst : f32 to vector<8x128xf32>
    %19 = arith.select %17, %3, %18 : vector<8x128xi1>, vector<8x128xf32>
    %c8_i32_7 = arith.constant 8 : i32
    %20 = vector.broadcast %c8_i32_7 : i32 to vector<1x128xi32>
    %21 = arith.cmpi slt, %13, %20 : vector<1x128xi32>
    %cst_8 = arith.constant 0x7F800000 : f32
    %22 = vector.shape_cast %21 : vector<1x128xi1> to vector<1x128xi1>
    %23 = vector.broadcast %22 : vector<1x128xi1> to vector<8x128xi1>
    %24 = vector.broadcast %cst_8 : f32 to vector<8x128xf32>
    %25 = arith.select %23, %4, %24 : vector<8x128xi1>, vector<8x128xf32>
    %26 = vector.shape_cast %19 : vector<8x128xf32> to vector<8x128x1xf32>
    %27 = vector.shape_cast %25 : vector<8x128xf32> to vector<8x1x128xf32>
    %28 = vector.broadcast %26 : vector<8x128x1xf32> to vector<8x128x128xf32>
    %29 = vector.broadcast %27 : vector<8x1x128xf32> to vector<8x128x128xf32>
    %30 = arith.cmpf ogt, %28, %29 : vector<8x128x128xf32>
    %31 = arith.extui %30 : vector<8x128x128xi1> to vector<8x128x128xi32>
    %32 = arith.sitofp %31 : vector<8x128x128xi32> to vector<8x128x128xf32>
    %cst_9 = arith.constant dense<0.000000e+00> : vector<8x128xf32>
    %33 = vector.multi_reduction <add>, %32, %cst_9 [2] : vector<8x128x128xf32> to vector<8x128xf32>
    %34 = vector.shape_cast %5 : vector<8x128xf32> to vector<8x1x128xf32>
    %35 = vector.broadcast %34 : vector<8x1x128xf32> to vector<8x128x128xf32>
    %36 = arith.mulf %32, %35 : vector<8x128x128xf32>
    %cst_10 = arith.constant dense<0.000000e+00> : vector<8x128xf32>
    %37 = vector.multi_reduction <add>, %36, %cst_10 [2] : vector<8x128x128xf32> to vector<8x128xf32>
    %c0_11 = arith.constant 0 : index
    %c0_12 = arith.constant 0 : index
    %38 = vector.load %arg9[%c0_11, %c0_12] : memref<8x128xf32, #tpu.memory_space<vmem>>, vector<8x128xf32>
    %39 = arith.addf %38, %33 : vector<8x128xf32>
    %c0_13 = arith.constant 0 : index
    %c0_14 = arith.constant 0 : index
    %40 = vector.load %arg9[%c0_13, %c0_14] : memref<8x128xf32, #tpu.memory_space<vmem>>, vector<8x128xf32>
    tpu.vector_store %arg9[%c0_13, %c0_14], %39 {strides = array<i32>} : memref<8x128xf32, #tpu.memory_space<vmem>>, vector<8x128xf32>,
    %c0_15 = arith.constant 0 : index
    %c0_16 = arith.constant 0 : index
    %41 = vector.load %arg10[%c0_15, %c0_16] : memref<8x128xf32, #tpu.memory_space<vmem>>, vector<8x128xf32>
    %42 = arith.addf %41, %37 : vector<8x128xf32>
    %c0_17 = arith.constant 0 : index
    %c0_18 = arith.constant 0 : index
    %43 = vector.load %arg10[%c0_17, %c0_18] : memref<8x128xf32, #tpu.memory_space<vmem>>, vector<8x128xf32>
    tpu.vector_store %arg10[%c0_17, %c0_18], %42 {strides = array<i32>} : memref<8x128xf32, #tpu.memory_space<vmem>>, vector<8x128xf32>,
    %c0_i32_19 = arith.constant 0 : i32
    %44 = arith.cmpi eq, %arg2, %c0_i32_19 : i32
    %45 = arith.extui %44 : i1 to i32
    %c0_i32_20 = arith.constant 0 : i32
    %46 = arith.cmpi ne, %45, %c0_i32_20 : i32
    scf.if %46 {
      %c0_21 = arith.constant 0 : index
      %c0_22 = arith.constant 0 : index
      %47 = vector.load %arg9[%c0_21, %c0_22] : memref<8x128xf32, #tpu.memory_space<vmem>>, vector<8x128xf32>
      %c0_23 = arith.constant 0 : index
      %c0_24 = arith.constant 0 : index
      %48 = vector.load %arg10[%c0_23, %c0_24] : memref<8x128xf32, #tpu.memory_space<vmem>>, vector<8x128xf32>
      %c0_25 = arith.constant 0 : index
      %c0_26 = arith.constant 0 : index
      %49 = vector.load %arg3[%c0_25, %c0_26] : memref<8x128xf32, #tpu.memory_space<vmem>>, vector<8x128xf32>
      %50 = vector.shape_cast %47 : vector<8x128xf32> to vector<1x1x8x128xf32>
      %c0_27 = arith.constant 0 : index
      %c0_28 = arith.constant 0 : index
      %c0_29 = arith.constant 0 : index
      %c0_30 = arith.constant 0 : index
      %51 = vector.load %arg8[%c0_27, %c0_28, %c0_29, %c0_30] : memref<1x1x8x128xf32, #tpu.memory_space<vmem>>, vector<1x1x8x128xf32>
      tpu.vector_store %arg8[%c0_27, %c0_28, %c0_29, %c0_30], %50 {strides = array<i32>} : memref<1x1x8x128xf32, #tpu.memory_space<vmem>>, vector<1x1x8x128xf32>,
      %52 = arith.mulf %49, %47 : vector<8x128xf32>
      %53 = arith.subf %52, %48 : vector<8x128xf32>
      %cst_31 = arith.constant 1.000000e+00 : f32
      %54 = vector.broadcast %cst_31 : f32 to vector<8x128xf32>
      %55 = arith.mulf %54, %53 : vector<8x128xf32>
      %56 = arith.subf %47, %55 : vector<8x128xf32>
      %57 = vector.shape_cast %56 : vector<8x128xf32> to vector<1x1x8x128xf32>
      %c0_32 = arith.constant 0 : index
      %c0_33 = arith.constant 0 : index
      %c0_34 = arith.constant 0 : index
      %c0_35 = arith.constant 0 : index
      %58 = vector.load %arg7[%c0_32, %c0_33, %c0_34, %c0_35] : memref<1x1x8x128xf32, #tpu.memory_space<vmem>>, vector<1x1x8x128xf32>
      tpu.vector_store %arg7[%c0_32, %c0_33, %c0_34, %c0_35], %57 {strides = array<i32>} : memref<1x1x8x128xf32, #tpu.memory_space<vmem>>, vector<1x1x8x128xf32>,
    } else {
    }
    return
  }
  func.func @transform_0(%arg0: i32, %arg1: i32, %arg2: i32) -> (i32, i32) {
    %c0_i32 = arith.constant 0 : i32
    return %arg0, %arg1 : i32, i32
  }
  func.func @transform_1(%arg0: i32, %arg1: i32, %arg2: i32) -> (i32, i32) {
    %c0_i32 = arith.constant 0 : i32
    return %arg0, %arg1 : i32, i32
  }
  func.func @transform_2(%arg0: i32, %arg1: i32, %arg2: i32) -> (i32, i32) {
    %c0_i32 = arith.constant 0 : i32
    return %arg0, %arg2 : i32, i32
  }
  func.func @transform_3(%arg0: i32, %arg1: i32, %arg2: i32) -> (i32, i32) {
    %c0_i32 = arith.constant 0 : i32
    return %arg0, %arg2 : i32, i32
  }
  func.func @transform_4(%arg0: i32, %arg1: i32, %arg2: i32) -> (i32, i32, i32, i32) {
    %c0_i32 = arith.constant 0 : i32
    %c0_i32_0 = arith.constant 0 : i32
    %c0_i32_1 = arith.constant 0 : i32
    return %arg0, %arg1, %c0_i32, %c0_i32_0 : i32, i32, i32, i32
  }
  func.func @transform_5(%arg0: i32, %arg1: i32, %arg2: i32) -> (i32, i32, i32, i32) {
    %c0_i32 = arith.constant 0 : i32
    %c0_i32_0 = arith.constant 0 : i32
    %c0_i32_1 = arith.constant 0 : i32
    return %arg0, %arg1, %c0_i32, %c0_i32_0 : i32, i32, i32, i32
  }
}

</mosaic_0001>

<llo_original>
// kernel: tpu_custom_call.1
$region0: #{tpu_custom_call.1}
  #allocation0 [shape = 'u32[]', space=smem, size = 0x4, offset = 0x4, fixed_abs, tag = 'smem constant byte address 0x4 - core index']
  #allocation1 [shape = 'u32[72,128]{1,0:T(1,128)}', space=vmem, size = 0x9000, scoped, tag = 'internal scratch']
  #allocation2 [shape = 'f32[8,128]{1,0:T(8,128)}', space=vmem, size = 0x1000, scoped, tag = 'scratch operand']
  #allocation3 [shape = 'f32[8,128]{1,0:T(8,128)}', space=vmem, size = 0x1000, scoped, tag = 'scratch operand']
  %s0 = inlined_call_operand.hbm [shape: f32[8,128], index: 0, kind: input, shape index: {}]
  %s1 = inlined_call_operand.hbm [shape: f32[8,128], index: 1, kind: input, shape index: {}]
  %s2 = inlined_call_operand.hbm [shape: f32[8,128], index: 2, kind: input, shape index: {}]
  %s3 = inlined_call_operand.hbm [shape: f32[8,128], index: 3, kind: input, shape index: {}]
  %s4 = inlined_call_operand.hbm [shape: f32[1,1,8,128], index: 4, kind: output, shape index: {0}]
  %s5 = inlined_call_operand.hbm [shape: f32[1,1,8,128], index: 5, kind: output, shape index: {1}]
  %6 = xla_tuple %s4, %s5
  %s7 = sld [smem:[#allocation0]]
  $region58: #{tpu_custom_call.1} parent=0
    _
  %s9 = ssub.s32 1, %s7
  %s10 = scalar_select 0, %s9, %s7
  $region1: #{tpu_custom_call.1} parent=0
    #allocation4 [shape = 'u8[4096]{0}', space=vmem, size = 0x1000, scoped, tag = 'input window, operand 0, single buffered']
    #allocation5 [shape = 's32[1]{0}', space=sflag, size = 0x4, scoped, tag = 'scoped memory for tpu_custom_call.1']
    #allocation6 [shape = 's32[1]{0}', space=sflag, size = 0x4, scoped, tag = 'scoped memory for tpu_custom_call.1']
    #allocation7 [shape = 'u8[4096]{0}', space=vmem, size = 0x1000, scoped, tag = 'input window, operand 1, single buffered']
    #allocation8 [shape = 's32[1]{0}', space=sflag, size = 0x4, scoped, tag = 'scoped memory for tpu_custom_call.1']
    #allocation9 [shape = 'u8[4096]{0}', space=vmem, size = 0x1000, scoped, tag = 'input window, operand 2, single buffered']
    #allocation10 [shape = 'u8[4096]{0}', space=vmem, size = 0x1000, scoped, tag = 'input window, operand 3, single buffered']
    #allocation11 [shape = 's32[1]{0}', space=sflag, size = 0x4, scoped, tag = 'scoped memory for tpu_custom_call.1']
    #allocation12 [shape = 'u8[4096]{0}', space=vmem, size = 0x1000, scoped, tag = 'output window, operand 0, single buffered']
    #allocation13 [shape = 'u8[4096]{0}', space=vmem, size = 0x1000, scoped, tag = 'output window, operand 1, single buffered']
    #allocation14 [shape = 's32[1]{0}', space=sflag, size = 0x4, scoped, tag = 'scoped memory for tpu_custom_call.1']
    %11 = vsyncpa [#allocation5], 0
    %12 = vsyncpa [#allocation8], 0
    %13 = vsyncpa [#allocation11], 0
    %14 = vsyncpa [#allocation6], 0
    %15 = vsyncpa [#allocation14], 0
    // Predicated region
    $region2: #{tpu_custom_call.1} parent=1 // pred_check
      _
    $region3: #{tpu_custom_call.1} parent=1 // pred_check_branch
      %17 = sbr.rel (0) target = $region5
    $region4: #{tpu_custom_call.1} parent=1 // pred_region
      %19 = vsyncadd [#allocation5], 0
      %s21 = sshll.u32 %s0, 4
      %s22 = int_to_ptr.hbm [resolvable:$true] %s21
      %s23 = sshll.u32 [#allocation4], 4
      %s24 = int_to_ptr.vmem [resolvable:$true] %s23
      %26 = dma.hbm_to_vmem [thread:$0]  %s22, 128, %s24, [#allocation5]
    $region5: #{tpu_custom_call.1} parent=1 // pred_fallthru
      _
    // Predicated region
    $region6: #{tpu_custom_call.1} parent=1 // pred_check
      _
    $region7: #{tpu_custom_call.1} parent=1 // pred_check_branch
      %28 = sbr.rel (0) target = $region9
    $region8: #{tpu_custom_call.1} parent=1 // pred_region
      %30 = vsyncadd [#allocation8], 0
      %s32 = sshll.u32 %s1, 4
      %s33 = int_to_ptr.hbm [resolvable:$true] %s32
      %s34 = sshll.u32 [#allocation7], 4
      %s35 = int_to_ptr.vmem [resolvable:$true] %s34
      %37 = dma.hbm_to_vmem [thread:$0]  %s33, 128, %s35, [#allocation8]
    $region9: #{tpu_custom_call.1} parent=1 // pred_fallthru
      _
    // Predicated region
    $region10: #{tpu_custom_call.1} parent=1 // pred_check
      _
    $region11: #{tpu_custom_call.1} parent=1 // pred_check_branch
      %39 = sbr.rel (0) target = $region13
    $region12: #{tpu_custom_call.1} parent=1 // pred_region
      %41 = vsyncadd [#allocation8], 0
      %s43 = sshll.u32 %s2, 4
      %s44 = int_to_ptr.hbm [resolvable:$true] %s43
      %s45 = sshll.u32 [#allocation9], 4
      %s46 = int_to_ptr.vmem [resolvable:$true] %s45
      %48 = dma.hbm_to_vmem [thread:$0]  %s44, 128, %s46, [#allocation8]
    $region13: #{tpu_custom_call.1} parent=1 // pred_fallthru
      _
    // Predicated region
    $region14: #{tpu_custom_call.1} parent=1 // pred_check
      _
    $region15: #{tpu_custom_call.1} parent=1 // pred_check_branch
      %50 = sbr.rel (0) target = $region17
    $region16: #{tpu_custom_call.1} parent=1 // pred_region
      %52 = vsyncadd [#allocation11], 0
      %s54 = sshll.u32 %s3, 4
      %s55 = int_to_ptr.hbm [resolvable:$true] %s54
      %s56 = sshll.u32 [#allocation10], 4
      %s57 = int_to_ptr.vmem [resolvable:$true] %s56
      %59 = dma.hbm_to_vmem [thread:$0]  %s55, 128, %s57, [#allocation11]
    $region17: #{tpu_custom_call.1} parent=1 // pred_fallthru
      _
    // Predicated region
    $region18: #{tpu_custom_call.1} parent=1 // pred_check
      _
    $region19: #{tpu_custom_call.1} parent=1 // pred_check_branch
      %61 = sbr.rel (0) target = $region21
    $region20: #{tpu_custom_call.1} parent=1 // pred_region
      %63 = dma.done [#allocation5], 128
    $region21: #{tpu_custom_call.1} parent=1 // pred_fallthru
      _
    // Predicated region
    $region22: #{tpu_custom_call.1} parent=1 // pred_check
      _
    $region23: #{tpu_custom_call.1} parent=1 // pred_check_branch
      %65 = sbr.rel (0) target = $region25
    $region24: #{tpu_custom_call.1} parent=1 // pred_region
      %67 = dma.done [#allocation8], 128
    $region25: #{tpu_custom_call.1} parent=1 // pred_fallthru
      _
    // Predicated region
    $region26: #{tpu_custom_call.1} parent=1 // pred_check
      _
    $region27: #{tpu_custom_call.1} parent=1 // pred_check_branch
      %69 = sbr.rel (0) target = $region29
    $region28: #{tpu_custom_call.1} parent=1 // pred_region
      %71 = dma.done [#allocation8], 128
    $region29: #{tpu_custom_call.1} parent=1 // pred_fallthru
      _
    // Predicated region
    $region30: #{tpu_custom_call.1} parent=1 // pred_check
      _
    $region31: #{tpu_custom_call.1} parent=1 // pred_check_branch
      %73 = sbr.rel (0) target = $region33
    $region32: #{tpu_custom_call.1} parent=1 // pred_region
      %75 = dma.done [#allocation11], 128
    $region33: #{tpu_custom_call.1} parent=1 // pred_fallthru
      _
    %p76 = scmp.eq.s32.totalorder 0, 0
    // Predicated region
    $region34: #{tpu_custom_call.1} parent=1 // pred_check
      %p77 = pneg %p76
    $region35: #{tpu_custom_call.1} parent=1 // pred_check_branch
      %79 = sbr.rel (%p77) target = $region37
    $region36: #{tpu_custom_call.1} parent=1 // pred_region
      %80 = vst [vmem:[#allocation2] sm:$0xff] 0.0
      %81 = vst [vmem:[#allocation3] sm:$0xff] 0.0
    $region37: #{tpu_custom_call.1} parent=1 // pred_fallthru
      _
    %v82 = vld [vmem:[#allocation7] sm:$0xff]
    %v83 = vld [vmem:[#allocation10] sm:$0xff]
    %v84 = vld [vmem:[#allocation9] sm:$0xff]
    %v85 = vlaneseq
    %v86 = vand.u32 %v85, 127
    %s87 = smul.u32 0, 128
    %v88 = vstv %s87
    %v89 = vadd.s32 %v86, %v88
    %s90 = smul.u32 0, 128
    %v91 = vstv %s90
    %v92 = vadd.s32 %v86, %v91
    %vm93 = vcmp.lt.s32.totalorder %v89, 8
    %v94 = vsel %vm93, 1, 0
    %vm95 = vcmp.eq.s32.totalorder %v94, 1
    %v96 = vsel %vm95, %v82, -inf
    %vm97 = vcmp.lt.s32.totalorder %v92, 8
    %v98 = vsel %vm97, 1, 0
    %vm99 = vcmp.eq.s32.totalorder %v98, 1
    %v100 = vsel %vm99, %v83, inf
    %v101 = vperm.slane %v96, 0
    %v102 = vlaneseq
    %v103 = vshrl.u32 %v102, 7
    %105 = vset.pattern.permute.xlu0 %v103
    %106 = vperm.xlu0 %105, %v101
    %v107 = vpop.permute.xlu0 %106
    %v108 = vlaneseq
    %v109 = vshrl.u32 %v108, 7
    %v110 = vadd.s32 %v109, 8
    %111 = vset.pattern.permute.xlu0 %v110
    %112 = vperm.xlu0 %111, %v101
    %v113 = vpop.permute.xlu0 %112
    %v114 = vlaneseq
    %v115 = vshrl.u32 %v114, 7
    %v116 = vadd.s32 %v115, 16
    %117 = vset.pattern.permute.xlu0 %v116
    %118 = vperm.xlu0 %117, %v101
    %v119 = vpop.permute.xlu0 %118
    %v120 = vlaneseq
    %v121 = vshrl.u32 %v120, 7
    %v122 = vadd.s32 %v121, 24
    %123 = vset.pattern.permute.xlu0 %v122
    %124 = vperm.xlu0 %123, %v101
    %v125 = vpop.permute.xlu0 %124
    %v126 = vlaneseq
    %v127 = vshrl.u32 %v126, 7
    %v128 = vadd.s32 %v127, 32
    %129 = vset.pattern.permute.xlu0 %v128
    %130 = vperm.xlu0 %129, %v101
    %v131 = vpop.permute.xlu0 %130
    %v132 = vlaneseq
    %v133 = vshrl.u32 %v132, 7
    %v134 = vadd.s32 %v133, 40
    %135 = vset.pattern.permute.xlu0 %v134
    %136 = vperm.xlu0 %135, %v101
    %v137 = vpop.permute.xlu0 %136
    %v138 = vlaneseq
    %v139 = vshrl.u32 %v138, 7
    %v140 = vadd.s32 %v139, 48
    %141 = vset.pattern.permute.xlu0 %v140
    %142 = vperm.xlu0 %141, %v101
    %v143 = vpop.permute.xlu0 %142
    %v144 = vlaneseq
    %v145 = vshrl.u32 %v144, 7
    %v146 = vadd.s32 %v145, 56
    %147 = vset.pattern.permute.xlu0 %v146
    %148 = vperm.xlu0 %147, %v101
    %v149 = vpop.permute.xlu0 %148
    %v150 = vlaneseq
    %v151 = vshrl.u32 %v150, 7
    %v152 = vadd.s32 %v151, 64
    %153 = vset.pattern.permute.xlu0 %v152
    %154 = vperm.xlu0 %153, %v101
    %v155 = vpop.permute.xlu0 %154
    %v156 = vlaneseq
    %v157 = vshrl.u32 %v156, 7
    %v158 = vadd.s32 %v157, 72
    %159 = vset.pattern.permute.xlu0 %v158
    %160 = vperm.xlu0 %159, %v101
    %v161 = vpop.permute.xlu0 %160
    %v162 = vlaneseq
    %v163 = vshrl.u32 %v162, 7
    %v164 = vadd.s32 %v163, 80
    %165 = vset.pattern.permute.xlu0 %v164
    %166 = vperm.xlu0 %165, %v101
    %v167 = vpop.permute.xlu0 %166
    %v168 = vlaneseq
    %v169 = vshrl.u32 %v168, 7
    %v170 = vadd.s32 %v169, 88
    %171 = vset.pattern.permute.xlu0 %v170
    %172 = vperm.xlu0 %171, %v101
    %v173 = vpop.permute.xlu0 %172
    %v174 = vlaneseq
    %v175 = vshrl.u32 %v174, 7
    %v176 = vadd.s32 %v175, 96
    %177 = vset.pattern.permute.xlu0 %v176
    %178 = vperm.xlu0 %177, %v101
    %v179 = vpop.permute.xlu0 %178
    %v180 = vlaneseq
    %v181 = vshrl.u32 %v180, 7
    %v182 = vadd.s32 %v181, 104
    %183 = vset.pattern.permute.xlu0 %v182
    %184 = vperm.xlu0 %183, %v101
    %v185 = vpop.permute.xlu0 %184
    %v186 = vlaneseq
    %v187 = vshrl.u32 %v186, 7
    %v188 = vadd.s32 %v187, 112
    %189 = vset.pattern.permute.xlu0 %v188
    %190 = vperm.xlu0 %189, %v101
    %v191 = vpop.permute.xlu0 %190
    %v192 = vlaneseq
    %v193 = vshrl.u32 %v192, 7
    %v194 = vadd.s32 %v193, 120
    %195 = vset.pattern.permute.xlu0 %v194
    %196 = vperm.xlu0 %195, %v101
    %v197 = vpop.permute.xlu0 %196
    %v198 = vperm.slane %v96, 1
    %v199 = vlaneseq
    %v200 = vshrl.u32 %v199, 7
    %202 = vset.pattern.permute.xlu0 %v200
    %203 = vperm.xlu0 %202, %v198
    %v204 = vpop.permute.xlu0 %203
    %v205 = vlaneseq
    %v206 = vshrl.u32 %v205, 7
    %v207 = vadd.s32 %v206, 8
    %208 = vset.pattern.permute.xlu0 %v207
    %209 = vperm.xlu0 %208, %v198
    %v210 = vpop.permute.xlu0 %209
    %v211 = vlaneseq
    %v212 = vshrl.u32 %v211, 7
    %v213 = vadd.s32 %v212, 16
    %214 = vset.pattern.permute.xlu0 %v213
    %215 = vperm.xlu0 %214, %v198
    %v216 = vpop.permute.xlu0 %215
    %v217 = vlaneseq
    %v218 = vshrl.u32 %v217, 7
    %v219 = vadd.s32 %v218, 24
    %220 = vset.pattern.permute.xlu0 %v219
    %221 = vperm.xlu0 %220, %v198
    %v222 = vpop.permute.xlu0 %221
    %v223 = vlaneseq
    %v224 = vshrl.u32 %v223, 7
    %v225 = vadd.s32 %v224, 32
    %226 = vset.pattern.permute.xlu0 %v225
    %227 = vperm.xlu0 %226, %v198
    %v228 = vpop.permute.xlu0 %227
    %v229 = vlaneseq
    %v230 = vshrl.u32 %v229, 7
    %v231 = vadd.s32 %v230, 40
    %232 = vset.pattern.permute.xlu0 %v231
    %233 = vperm.xlu0 %232, %v198
    %v234 = vpop.permute.xlu0 %233
    %v235 = vlaneseq
    %v236 = vshrl.u32 %v235, 7
    %v237 = vadd.s32 %v236, 48
    %238 = vset.pattern.permute.xlu0 %v237
    %239 = vperm.xlu0 %238, %v198
    %v240 = vpop.permute.xlu0 %239
    %v241 = vlaneseq
    %v242 = vshrl.u32 %v241, 7
    %v243 = vadd.s32 %v242, 56
    %244 = vset.pattern.permute.xlu0 %v243
    %245 = vperm.xlu0 %244, %v198
    %v246 = vpop.permute.xlu0 %245
    %v247 = vlaneseq
    %v248 = vshrl.u32 %v247, 7
    %v249 = vadd.s32 %v248, 64
    %250 = vset.pattern.permute.xlu0 %v249
    %251 = vperm.xlu0 %250, %v198
    %v252 = vpop.permute.xlu0 %251
    %v253 = vlaneseq
    %v254 = vshrl.u32 %v253, 7
    %v255 = vadd.s32 %v254, 72
    %256 = vset.pattern.permute.xlu0 %v255
    %257 = vperm.xlu0 %256, %v198
    %v258 = vpop.permute.xlu0 %257
    %v259 = vlaneseq
    %v260 = vshrl.u32 %v259, 7
    %v261 = vadd.s32 %v260, 80
    %262 = vset.pattern.permute.xlu0 %v261
    %263 = vperm.xlu0 %262, %v198
    %v264 = vpop.permute.xlu0 %263
    %v265 = vlaneseq
    %v266 = vshrl.u32 %v265, 7
    %v267 = vadd.s32 %v266, 88
    %268 = vset.pattern.permute.xlu0 %v267
    %269 = vperm.xlu0 %268, %v198
    %v270 = vpop.permute.xlu0 %269
    %v271 = vlaneseq
    %v272 = vshrl.u32 %v271, 7
    %v273 = vadd.s32 %v272, 96
    %274 = vset.pattern.permute.xlu0 %v273
    %275 = vperm.xlu0 %274, %v198
    %v276 = vpop.permute.xlu0 %275
    %v277 = vlaneseq
    %v278 = vshrl.u32 %v277, 7
    %v279 = vadd.s32 %v278, 104
    %280 = vset.pattern.permute.xlu0 %v279
    %281 = vperm.xlu0 %280, %v198
    %v282 = vpop.permute.xlu0 %281
    %v283 = vlaneseq
    %v284 = vshrl.u32 %v283, 7
    %v285 = vadd.s32 %v284, 112
    %286 = vset.pattern.permute.xlu0 %v285
    %287 = vperm.xlu0 %286, %v198
    %v288 = vpop.permute.xlu0 %287
    %v289 = vlaneseq
    %v290 = vshrl.u32 %v289, 7
    %v291 = vadd.s32 %v290, 120
    %292 = vset.pattern.permute.xlu0 %v291
    %293 = vperm.xlu0 %292, %v198
    %v294 = vpop.permute.xlu0 %293
    %v295 = vperm.slane %v96, 2
    %v296 = vlaneseq
    %v297 = vshrl.u32 %v296, 7
    %299 = vset.pattern.permute.xlu0 %v297
    %300 = vperm.xlu0 %299, %v295
    %v301 = vpop.permute.xlu0 %300
    %v302 = vlaneseq
    %v303 = vshrl.u32 %v302, 7
    %v304 = vadd.s32 %v303, 8
    %305 = vset.pattern.permute.xlu0 %v304
    %306 = vperm.xlu0 %305, %v295
    %v307 = vpop.permute.xlu0 %306
    %v308 = vlaneseq
    %v309 = vshrl.u32 %v308, 7
    %v310 = vadd.s32 %v309, 16
    %311 = vset.pattern.permute.xlu0 %v310
    %312 = vperm.xlu0 %311, %v295
    %v313 = vpop.permute.xlu0 %312
    %v314 = vlaneseq
    %v315 = vshrl.u32 %v314, 7
    %v316 = vadd.s32 %v315, 24
    %317 = vset.pattern.permute.xlu0 %v316
    %318 = vperm.xlu0 %317, %v295
    %v319 = vpop.permute.xlu0 %318
    %v320 = vlaneseq
    %v321 = vshrl.u32 %v320, 7
    %v322 = vadd.s32 %v321, 32
    %323 = vset.pattern.permute.xlu0 %v322
    %324 = vperm.xlu0 %323, %v295
    %v325 = vpop.permute.xlu0 %324
    %v326 = vlaneseq
    %v327 = vshrl.u32 %v326, 7
    %v328 = vadd.s32 %v327, 40
    %329 = vset.pattern.permute.xlu0 %v328
    %330 = vperm.xlu0 %329, %v295
    %v331 = vpop.permute.xlu0 %330
    %v332 = vlaneseq
    %v333 = vshrl.u32 %v332, 7
    %v334 = vadd.s32 %v333, 48
    %335 = vset.pattern.permute.xlu0 %v334
    %336 = vperm.xlu0 %335, %v295
    %v337 = vpop.permute.xlu0 %336
    %v338 = vlaneseq
    %v339 = vshrl.u32 %v338, 7
    %v340 = vadd.s32 %v339, 56
    %341 = vset.pattern.permute.xlu0 %v340
    %342 = vperm.xlu0 %341, %v295
    %v343 = vpop.permute.xlu0 %342
    %v344 = vlaneseq
    %v345 = vshrl.u32 %v344, 7
    %v346 = vadd.s32 %v345, 64
    %347 = vset.pattern.permute.xlu0 %v346
    %348 = vperm.xlu0 %347, %v295
    %v349 = vpop.permute.xlu0 %348
    %v350 = vlaneseq
    %v351 = vshrl.u32 %v350, 7
    %v352 = vadd.s32 %v351, 72
    %353 = vset.pattern.permute.xlu0 %v352
    %354 = vperm.xlu0 %353, %v295
    %v355 = vpop.permute.xlu0 %354
    %v356 = vlaneseq
    %v357 = vshrl.u32 %v356, 7
    %v358 = vadd.s32 %v357, 80
    %359 = vset.pattern.permute.xlu0 %v358
    %360 = vperm.xlu0 %359, %v295
    %v361 = vpop.permute.xlu0 %360
    %v362 = vlaneseq
    %v363 = vshrl.u32 %v362, 7
    %v364 = vadd.s32 %v363, 88
    %365 = vset.pattern.permute.xlu0 %v364
    %366 = vperm.xlu0 %365, %v295
    %v367 = vpop.permute.xlu0 %366
    %v368 = vlaneseq
    %v369 = vshrl.u32 %v368, 7
    %v370 = vadd.s32 %v369, 96
    %371 = vset.pattern.permute.xlu0 %v370
    %372 = vperm.xlu0 %371, %v295
    %v373 = vpop.permute.xlu0 %372
    %v374 = vlaneseq
    %v375 = vshrl.u32 %v374, 7
    %v376 = vadd.s32 %v375, 104
    %377 = vset.pattern.permute.xlu0 %v376
    %378 = vperm.xlu0 %377, %v295
    %v379 = vpop.permute.xlu0 %378
    %v380 = vlaneseq
    %v381 = vshrl.u32 %v380, 7
    %v382 = vadd.s32 %v381, 112
    %383 = vset.pattern.permute.xlu0 %v382
    %384 = vperm.xlu0 %383, %v295
    %v385 = vpop.permute.xlu0 %384
    %v386 = vlaneseq
    %v387 = vshrl.u32 %v386, 7
    %v388 = vadd.s32 %v387, 120
    %389 = vset.pattern.permute.xlu0 %v388
    %390 = vperm.xlu0 %389, %v295
    %v391 = vpop.permute.xlu0 %390
    %v392 = vperm.slane %v96, 3
    %v393 = vlaneseq
    %v394 = vshrl.u32 %v393, 7
    %396 = vset.pattern.permute.xlu0 %v394
    %397 = vperm.xlu0 %396, %v392
    %v398 = vpop.permute.xlu0 %397
    %v399 = vlaneseq
    %v400 = vshrl.u32 %v399, 7
    %v401 = vadd.s32 %v400, 8
    %402 = vset.pattern.permute.xlu0 %v401
    %403 = vperm.xlu0 %402, %v392
    %v404 = vpop.permute.xlu0 %403
    %v405 = vlaneseq
    %v406 = vshrl.u32 %v405, 7
    %v407 = vadd.s32 %v406, 16
    %408 = vset.pattern.permute.xlu0 %v407
    %409 = vperm.xlu0 %408, %v392
    %v410 = vpop.permute.xlu0 %409
    %v411 = vlaneseq
    %v412 = vshrl.u32 %v411, 7
    %v413 = vadd.s32 %v412, 24
    %414 = vset.pattern.permute.xlu0 %v413
    %415 = vperm.xlu0 %414, %v392
    %v416 = vpop.permute.xlu0 %415
    %v417 = vlaneseq
    %v418 = vshrl.u32 %v417, 7
    %v419 = vadd.s32 %v418, 32
    %420 = vset.pattern.permute.xlu0 %v419
    %421 = vperm.xlu0 %420, %v392
    %v422 = vpop.permute.xlu0 %421
    %v423 = vlaneseq
    %v424 = vshrl.u32 %v423, 7
    %v425 = vadd.s32 %v424, 40
    %426 = vset.pattern.permute.xlu0 %v425
    %427 = vperm.xlu0 %426, %v392
    %v428 = vpop.permute.xlu0 %427
    %v429 = vlaneseq
    %v430 = vshrl.u32 %v429, 7
    %v431 = vadd.s32 %v430, 48
    %432 = vset.pattern.permute.xlu0 %v431
    %433 = vperm.xlu0 %432, %v392
    %v434 = vpop.permute.xlu0 %433
    %v435 = vlaneseq
    %v436 = vshrl.u32 %v435, 7
    %v437 = vadd.s32 %v436, 56
    %438 = vset.pattern.permute.xlu0 %v437
    %439 = vperm.xlu0 %438, %v392
    %v440 = vpop.permute.xlu0 %439
    %v441 = vlaneseq
    %v442 = vshrl.u32 %v441, 7
    %v443 = vadd.s32 %v442, 64
    %444 = vset.pattern.permute.xlu0 %v443
    %445 = vperm.xlu0 %444, %v392
    %v446 = vpop.permute.xlu0 %445
    %v447 = vlaneseq
    %v448 = vshrl.u32 %v447, 7
    %v449 = vadd.s32 %v448, 72
    %450 = vset.pattern.permute.xlu0 %v449
    %451 = vperm.xlu0 %450, %v392
    %v452 = vpop.permute.xlu0 %451
    %v453 = vlaneseq
    %v454 = vshrl.u32 %v453, 7
    %v455 = vadd.s32 %v454, 80
    %456 = vset.pattern.permute.xlu0 %v455
    %457 = vperm.xlu0 %456, %v392
    %v458 = vpop.permute.xlu0 %457
    %v459 = vlaneseq
    %v460 = vshrl.u32 %v459, 7
    %v461 = vadd.s32 %v460, 88
    %462 = vset.pattern.permute.xlu0 %v461
    %463 = vperm.xlu0 %462, %v392
    %v464 = vpop.permute.xlu0 %463
    %v465 = vlaneseq
    %v466 = vshrl.u32 %v465, 7
    %v467 = vadd.s32 %v466, 96
    %468 = vset.pattern.permute.xlu0 %v467
    %469 = vperm.xlu0 %468, %v392
    %v470 = vpop.permute.xlu0 %469
    %v471 = vlaneseq
    %v472 = vshrl.u32 %v471, 7
    %v473 = vadd.s32 %v472, 104
    %474 = vset.pattern.permute.xlu0 %v473
    %475 = vperm.xlu0 %474, %v392
    %v476 = vpop.permute.xlu0 %475
    %v477 = vlaneseq
    %v478 = vshrl.u32 %v477, 7
    %v479 = vadd.s32 %v478, 112
    %480 = vset.pattern.permute.xlu0 %v479
    %481 = vperm.xlu0 %480, %v392
    %v482 = vpop.permute.xlu0 %481
    %v483 = vlaneseq
    %v484 = vshrl.u32 %v483, 7
    %v485 = vadd.s32 %v484, 120
    %486 = vset.pattern.permute.xlu0 %v485
    %487 = vperm.xlu0 %486, %v392
    %v488 = vpop.permute.xlu0 %487
    %v489 = vperm.slane %v96, 4
    %v490 = vlaneseq
    %v491 = vshrl.u32 %v490, 7
    %493 = vset.pattern.permute.xlu0 %v491
    %494 = vperm.xlu0 %493, %v489
    %v495 = vpop.permute.xlu0 %494
    %v496 = vlaneseq
    %v497 = vshrl.u32 %v496, 7
    %v498 = vadd.s32 %v497, 8
    %499 = vset.pattern.permute.xlu0 %v498
    %500 = vperm.xlu0 %499, %v489
    %v501 = vpop.permute.xlu0 %500
    %v502 = vlaneseq
    %v503 = vshrl.u32 %v502, 7
    %v504 = vadd.s32 %v503, 16
    %505 = vset.pattern.permute.xlu0 %v504
    %506 = vperm.xlu0 %505, %v489
    %v507 = vpop.permute.xlu0 %506
    %v508 = vlaneseq
    %v509 = vshrl.u32 %v508, 7
    %v510 = vadd.s32 %v509, 24
    %511 = vset.pattern.permute.xlu0 %v510
    %512 = vperm.xlu0 %511, %v489
    %v513 = vpop.permute.xlu0 %512
    %v514 = vlaneseq
    %v515 = vshrl.u32 %v514, 7
    %v516 = vadd.s32 %v515, 32
    %517 = vset.pattern.permute.xlu0 %v516
    %518 = vperm.xlu0 %517, %v489
    %v519 = vpop.permute.xlu0 %518
    %v520 = vlaneseq
    %v521 = vshrl.u32 %v520, 7
    %v522 = vadd.s32 %v521, 40
    %523 = vset.pattern.permute.xlu0 %v522
    %524 = vperm.xlu0 %523, %v489
    %v525 = vpop.permute.xlu0 %524
    %v526 = vlaneseq
    %v527 = vshrl.u32 %v526, 7
    %v528 = vadd.s32 %v527, 48
    %529 = vset.pattern.permute.xlu0 %v528
    %530 = vperm.xlu0 %529, %v489
    %v531 = vpop.permute.xlu0 %530
    %v532 = vlaneseq
    %v533 = vshrl.u32 %v532, 7
    %v534 = vadd.s32 %v533, 56
    %535 = vset.pattern.permute.xlu0 %v534
    %536 = vperm.xlu0 %535, %v489
    %v537 = vpop.permute.xlu0 %536
    %v538 = vlaneseq
    %v539 = vshrl.u32 %v538, 7
    %v540 = vadd.s32 %v539, 64
    %541 = vset.pattern.permute.xlu0 %v540
    %542 = vperm.xlu0 %541, %v489
    %v543 = vpop.permute.xlu0 %542
    %v544 = vlaneseq
    %v545 = vshrl.u32 %v544, 7
    %v546 = vadd.s32 %v545, 72
    %547 = vset.pattern.permute.xlu0 %v546
    %548 = vperm.xlu0 %547, %v489
    %v549 = vpop.permute.xlu0 %548
    %v550 = vlaneseq
    %v551 = vshrl.u32 %v550, 7
    %v552 = vadd.s32 %v551, 80
    %553 = vset.pattern.permute.xlu0 %v552
    %554 = vperm.xlu0 %553, %v489
    %v555 = vpop.permute.xlu0 %554
    %v556 = vlaneseq
    %v557 = vshrl.u32 %v556, 7
    %v558 = vadd.s32 %v557, 88
    %559 = vset.pattern.permute.xlu0 %v558
    %560 = vperm.xlu0 %559, %v489
    %v561 = vpop.permute.xlu0 %560
    %v562 = vlaneseq
    %v563 = vshrl.u32 %v562, 7
    %v564 = vadd.s32 %v563, 96
    %565 = vset.pattern.permute.xlu0 %v564
    %566 = vperm.xlu0 %565, %v489
    %v567 = vpop.permute.xlu0 %566
    %v568 = vlaneseq
    %v569 = vshrl.u32 %v568, 7
    %v570 = vadd.s32 %v569, 104
    %571 = vset.pattern.permute.xlu0 %v570
    %572 = vperm.xlu0 %571, %v489
    %v573 = vpop.permute.xlu0 %572
    %v574 = vlaneseq
    %v575 = vshrl.u32 %v574, 7
    %v576 = vadd.s32 %v575, 112
    %577 = vset.pattern.permute.xlu0 %v576
    %578 = vperm.xlu0 %577, %v489
    %v579 = vpop.permute.xlu0 %578
    %v580 = vlaneseq
    %v581 = vshrl.u32 %v580, 7
    %v582 = vadd.s32 %v581, 120
    %583 = vset.pattern.permute.xlu0 %v582
    %584 = vperm.xlu0 %583, %v489
    %v585 = vpop.permute.xlu0 %584
    %v586 = vperm.slane %v96, 5
    %v587 = vlaneseq
    %v588 = vshrl.u32 %v587, 7
    %590 = vset.pattern.permute.xlu0 %v588
    %591 = vperm.xlu0 %590, %v586
    %v592 = vpop.permute.xlu0 %591
    %v593 = vlaneseq
    %v594 = vshrl.u32 %v593, 7
    %v595 = vadd.s32 %v594, 8
    %596 = vset.pattern.permute.xlu0 %v595
    %597 = vperm.xlu0 %596, %v586
    %v598 = vpop.permute.xlu0 %597
    %v599 = vlaneseq
    %v600 = vshrl.u32 %v599, 7
    %v601 = vadd.s32 %v600, 16
    %602 = vset.pattern.permute.xlu0 %v601
    %603 = vperm.xlu0 %602, %v586
    %v604 = vpop.permute.xlu0 %603
    %v605 = vlaneseq
    %v606 = vshrl.u32 %v605, 7
    %v607 = vadd.s32 %v606, 24
    %608 = vset.pattern.permute.xlu0 %v607
    %609 = vperm.xlu0 %608, %v586
    %v610 = vpop.permute.xlu0 %609
    %v611 = vlaneseq
    %v612 = vshrl.u32 %v611, 7
    %v613 = vadd.s32 %v612, 32
    %614 = vset.pattern.permute.xlu0 %v613
    %615 = vperm.xlu0 %614, %v586
    %v616 = vpop.permute.xlu0 %615
    %v617 = vlaneseq
    %v618 = vshrl.u32 %v617, 7
    %v619 = vadd.s32 %v618, 40
    %620 = vset.pattern.permute.xlu0 %v619
    %621 = vperm.xlu0 %620, %v586
    %v622 = vpop.permute.xlu0 %621
    %v623 = vlaneseq
    %v624 = vshrl.u32 %v623, 7
    %v625 = vadd.s32 %v624, 48
    %626 = vset.pattern.permute.xlu0 %v625
    %627 = vperm.xlu0 %626, %v586
    %v628 = vpop.permute.xlu0 %627
    %v629 = vlaneseq
    %v630 = vshrl.u32 %v629, 7
    %v631 = vadd.s32 %v630, 56
    %632 = vset.pattern.permute.xlu0 %v631
    %633 = vperm.xlu0 %632, %v586
    %v634 = vpop.permute.xlu0 %633
    %v635 = vlaneseq
    %v636 = vshrl.u32 %v635, 7
    %v637 = vadd.s32 %v636, 64
    %638 = vset.pattern.permute.xlu0 %v637
    %639 = vperm.xlu0 %638, %v586
    %v640 = vpop.permute.xlu0 %639
    %v641 = vlaneseq
    %v642 = vshrl.u32 %v641, 7
    %v643 = vadd.s32 %v642, 72
    %644 = vset.pattern.permute.xlu0 %v643
    %645 = vperm.xlu0 %644, %v586
    %v646 = vpop.permute.xlu0 %645
    %v647 = vlaneseq
    %v648 = vshrl.u32 %v647, 7
    %v649 = vadd.s32 %v648, 80
    %650 = vset.pattern.permute.xlu0 %v649
    %651 = vperm.xlu0 %650, %v586
    %v652 = vpop.permute.xlu0 %651
    %v653 = vlaneseq
    %v654 = vshrl.u32 %v653, 7
    %v655 = vadd.s32 %v654, 88
    %656 = vset.pattern.permute.xlu0 %v655
    %657 = vperm.xlu0 %656, %v586
    %v658 = vpop.permute.xlu0 %657
    %v659 = vlaneseq
    %v660 = vshrl.u32 %v659, 7
    %v661 = vadd.s32 %v660, 96
    %662 = vset.pattern.permute.xlu0 %v661
    %663 = vperm.xlu0 %662, %v586
    %v664 = vpop.permute.xlu0 %663
    %v665 = vlaneseq
    %v666 = vshrl.u32 %v665, 7
    %v667 = vadd.s32 %v666, 104
    %668 = vset.pattern.permute.xlu0 %v667
    %669 = vperm.xlu0 %668, %v586
    %v670 = vpop.permute.xlu0 %669
    %v671 = vlaneseq
    %v672 = vshrl.u32 %v671, 7
    %v673 = vadd.s32 %v672, 112
    %674 = vset.pattern.permute.xlu0 %v673
    %675 = vperm.xlu0 %674, %v586
    %v676 = vpop.permute.xlu0 %675
    %v677 = vlaneseq
    %v678 = vshrl.u32 %v677, 7
    %v679 = vadd.s32 %v678, 120
    %680 = vset.pattern.permute.xlu0 %v679
    %681 = vperm.xlu0 %680, %v586
    %v682 = vpop.permute.xlu0 %681
    %v683 = vperm.slane %v96, 6
    %v684 = vlaneseq
    %v685 = vshrl.u32 %v684, 7
    %687 = vset.pattern.permute.xlu0 %v685
    %688 = vperm.xlu0 %687, %v683
    %v689 = vpop.permute.xlu0 %688
    %v690 = vlaneseq
    %v691 = vshrl.u32 %v690, 7
    %v692 = vadd.s32 %v691, 8
    %693 = vset.pattern.permute.xlu0 %v692
    %694 = vperm.xlu0 %693, %v683
    %v695 = vpop.permute.xlu0 %694
    %v696 = vlaneseq
    %v697 = vshrl.u32 %v696, 7
    %v698 = vadd.s32 %v697, 16
    %699 = vset.pattern.permute.xlu0 %v698
    %700 = vperm.xlu0 %699, %v683
    %v701 = vpop.permute.xlu0 %700
    %v702 = vlaneseq
    %v703 = vshrl.u32 %v702, 7
    %v704 = vadd.s32 %v703, 24
    %705 = vset.pattern.permute.xlu0 %v704
    %706 = vperm.xlu0 %705, %v683
    %v707 = vpop.permute.xlu0 %706
    %v708 = vlaneseq
    %v709 = vshrl.u32 %v708, 7
    %v710 = vadd.s32 %v709, 32
    %711 = vset.pattern.permute.xlu0 %v710
    %712 = vperm.xlu0 %711, %v683
    %v713 = vpop.permute.xlu0 %712
    %v714 = vlaneseq
    %v715 = vshrl.u32 %v714, 7
    %v716 = vadd.s32 %v715, 40
    %717 = vset.pattern.permute.xlu0 %v716
    %718 = vperm.xlu0 %717, %v683
    %v719 = vpop.permute.xlu0 %718
    %v720 = vlaneseq
    %v721 = vshrl.u32 %v720, 7
    %v722 = vadd.s32 %v721, 48
    %723 = vset.pattern.permute.xlu0 %v722
    %724 = vperm.xlu0 %723, %v683
    %v725 = vpop.permute.xlu0 %724
    %v726 = vlaneseq
    %v727 = vshrl.u32 %v726, 7
    %v728 = vadd.s32 %v727, 56
    %729 = vset.pattern.permute.xlu0 %v728
    %730 = vperm.xlu0 %729, %v683
    %v731 = vpop.permute.xlu0 %730
    %v732 = vlaneseq
    %v733 = vshrl.u32 %v732, 7
    %v734 = vadd.s32 %v733, 64
    %735 = vset.pattern.permute.xlu0 %v734
    %736 = vperm.xlu0 %735, %v683
    %v737 = vpop.permute.xlu0 %736
    %v738 = vlaneseq
    %v739 = vshrl.u32 %v738, 7
    %v740 = vadd.s32 %v739, 72
    %741 = vset.pattern.permute.xlu0 %v740
    %742 = vperm.xlu0 %741, %v683
    %v743 = vpop.permute.xlu0 %742
    %v744 = vlaneseq
    %v745 = vshrl.u32 %v744, 7
    %v746 = vadd.s32 %v745, 80
    %747 = vset.pattern.permute.xlu0 %v746
    %748 = vperm.xlu0 %747, %v683
    %v749 = vpop.permute.xlu0 %748
    %v750 = vlaneseq
    %v751 = vshrl.u32 %v750, 7
    %v752 = vadd.s32 %v751, 88
    %753 = vset.pattern.permute.xlu0 %v752
    %754 = vperm.xlu0 %753, %v683
    %v755 = vpop.permute.xlu0 %754
    %v756 = vlaneseq
    %v757 = vshrl.u32 %v756, 7
    %v758 = vadd.s32 %v757, 96
    %759 = vset.pattern.permute.xlu0 %v758
    %760 = vperm.xlu0 %759, %v683
    %v761 = vpop.permute.xlu0 %760
    %v762 = vlaneseq
    %v763 = vshrl.u32 %v762, 7
    %v764 = vadd.s32 %v763, 104
    %765 = vset.pattern.permute.xlu0 %v764
    %766 = vperm.xlu0 %765, %v683
    %v767 = vpop.permute.xlu0 %766
    %v768 = vlaneseq
    %v769 = vshrl.u32 %v768, 7
    %v770 = vadd.s32 %v769, 112
    %771 = vset.pattern.permute.xlu0 %v770
    %772 = vperm.xlu0 %771, %v683
    %v773 = vpop.permute.xlu0 %772
    %v774 = vlaneseq
    %v775 = vshrl.u32 %v774, 7
    %v776 = vadd.s32 %v775, 120
    %777 = vset.pattern.permute.xlu0 %v776
    %778 = vperm.xlu0 %777, %v683
    %v779 = vpop.permute.xlu0 %778
    %v780 = vperm.slane %v96, 7
    %v781 = vlaneseq
    %v782 = vshrl.u32 %v781, 7
    %784 = vset.pattern.permute.xlu0 %v782
    %785 = vperm.xlu0 %784, %v780
    %v786 = vpop.permute.xlu0 %785
    %v787 = vlaneseq
    %v788 = vshrl.u32 %v787, 7
    %v789 = vadd.s32 %v788, 8
    %790 = vset.pattern.permute.xlu0 %v789
    %791 = vperm.xlu0 %790, %v780
    %v792 = vpop.permute.xlu0 %791
    %v793 = vlaneseq
    %v794 = vshrl.u32 %v793, 7
    %v795 = vadd.s32 %v794, 16
    %796 = vset.pattern.permute.xlu0 %v795
    %797 = vperm.xlu0 %796, %v780
    %v798 = vpop.permute.xlu0 %797
    %v799 = vlaneseq
    %v800 = vshrl.u32 %v799, 7
    %v801 = vadd.s32 %v800, 24
    %802 = vset.pattern.permute.xlu0 %v801
    %803 = vperm.xlu0 %802, %v780
    %v804 = vpop.permute.xlu0 %803
    %v805 = vlaneseq
    %v806 = vshrl.u32 %v805, 7
    %v807 = vadd.s32 %v806, 32
    %808 = vset.pattern.permute.xlu0 %v807
    %809 = vperm.xlu0 %808, %v780
    %v810 = vpop.permute.xlu0 %809
    %v811 = vlaneseq
    %v812 = vshrl.u32 %v811, 7
    %v813 = vadd.s32 %v812, 40
    %814 = vset.pattern.permute.xlu0 %v813
    %815 = vperm.xlu0 %814, %v780
    %v816 = vpop.permute.xlu0 %815
    %v817 = vlaneseq
    %v818 = vshrl.u32 %v817, 7
    %v819 = vadd.s32 %v818, 48
    %820 = vset.pattern.permute.xlu0 %v819
    %821 = vperm.xlu0 %820, %v780
    %v822 = vpop.permute.xlu0 %821
    %v823 = vlaneseq
    %v824 = vshrl.u32 %v823, 7
    %v825 = vadd.s32 %v824, 56
    %826 = vset.pattern.permute.xlu0 %v825
    %827 = vperm.xlu0 %826, %v780
    %v828 = vpop.permute.xlu0 %827
    %v829 = vlaneseq
    %v830 = vshrl.u32 %v829, 7
    %v831 = vadd.s32 %v830, 64
    %832 = vset.pattern.permute.xlu0 %v831
    %833 = vperm.xlu0 %832, %v780
    %v834 = vpop.permute.xlu0 %833
    %v835 = vlaneseq
    %v836 = vshrl.u32 %v835, 7
    %v837 = vadd.s32 %v836, 72
    %838 = vset.pattern.permute.xlu0 %v837
    %839 = vperm.xlu0 %838, %v780
    %v840 = vpop.permute.xlu0 %839
    %v841 = vlaneseq
    %v842 = vshrl.u32 %v841, 7
    %v843 = vadd.s32 %v842, 80
    %844 = vset.pattern.permute.xlu0 %v843
    %845 = vperm.xlu0 %844, %v780
    %v846 = vpop.permute.xlu0 %845
    %v847 = vlaneseq
    %v848 = vshrl.u32 %v847, 7
    %v849 = vadd.s32 %v848, 88
    %850 = vset.pattern.permute.xlu0 %v849
    %851 = vperm.xlu0 %850, %v780
    %v852 = vpop.permute.xlu0 %851
    %v853 = vlaneseq
    %v854 = vshrl.u32 %v853, 7
    %v855 = vadd.s32 %v854, 96
    %856 = vset.pattern.permute.xlu0 %v855
    %857 = vperm.xlu0 %856, %v780
    %v858 = vpop.permute.xlu0 %857
    %v859 = vlaneseq
    %v860 = vshrl.u32 %v859, 7
    %v861 = vadd.s32 %v860, 104
    %862 = vset.pattern.permute.xlu0 %v861
    %863 = vperm.xlu0 %862, %v780
    %v864 = vpop.permute.xlu0 %863
    %v865 = vlaneseq
    %v866 = vshrl.u32 %v865, 7
    %v867 = vadd.s32 %v866, 112
    %868 = vset.pattern.permute.xlu0 %v867
    %869 = vperm.xlu0 %868, %v780
    %v870 = vpop.permute.xlu0 %869
    %v871 = vlaneseq
    %v872 = vshrl.u32 %v871, 7
    %v873 = vadd.s32 %v872, 120
    %874 = vset.pattern.permute.xlu0 %v873
    %875 = vperm.xlu0 %874, %v780
    %v876 = vpop.permute.xlu0 %875
    %v878 = vrot.slane %v100, 1
    %v879 = vrot.slane %v100, 2
    %v880 = vrot.slane %v100, 3
    %v881 = vrot.slane %v100, 4
    %v882 = vrot.slane %v100, 5
    %v883 = vrot.slane %v100, 6
    %v884 = vrot.slane %v100, 7
    %v885 = vperm.slane %v100, 0
    %v886 = vperm.slane %v878, 0
    %v887 = vperm.slane %v879, 0
    %v888 = vperm.slane %v880, 0
    %v889 = vperm.slane %v881, 0
    %v890 = vperm.slane %v882, 0
    %v891 = vperm.slane %v883, 0
    %v892 = vperm.slane %v884, 0
    %vm901 = vcmp.gt.f32.partialorder %v107, %v885
    %vm902 = vcmp.gt.f32.partialorder %v113, %v885
    %vm903 = vcmp.gt.f32.partialorder %v119, %v885
    %vm904 = vcmp.gt.f32.partialorder %v125, %v885
    %vm905 = vcmp.gt.f32.partialorder %v131, %v885
    %vm906 = vcmp.gt.f32.partialorder %v137, %v885
    %vm907 = vcmp.gt.f32.partialorder %v143, %v885
    %vm908 = vcmp.gt.f32.partialorder %v149, %v885
    %vm909 = vcmp.gt.f32.partialorder %v155, %v885
    %vm910 = vcmp.gt.f32.partialorder %v161, %v885
    %vm911 = vcmp.gt.f32.partialorder %v167, %v885
    %vm912 = vcmp.gt.f32.partialorder %v173, %v885
    %vm913 = vcmp.gt.f32.partialorder %v179, %v885
    %vm914 = vcmp.gt.f32.partialorder %v185, %v885
    %vm915 = vcmp.gt.f32.partialorder %v191, %v885
    %vm916 = vcmp.gt.f32.partialorder %v197, %v885
    %vm917 = vcmp.gt.f32.partialorder %v204, %v886
    %vm918 = vcmp.gt.f32.partialorder %v210, %v886
    %vm919 = vcmp.gt.f32.partialorder %v216, %v886
    %vm920 = vcmp.gt.f32.partialorder %v222, %v886
    %vm921 = vcmp.gt.f32.partialorder %v228, %v886
    %vm922 = vcmp.gt.f32.partialorder %v234, %v886
    %vm923 = vcmp.gt.f32.partialorder %v240, %v886
    %vm924 = vcmp.gt.f32.partialorder %v246, %v886
    %vm925 = vcmp.gt.f32.partialorder %v252, %v886
    %vm926 = vcmp.gt.f32.partialorder %v258, %v886
    %vm927 = vcmp.gt.f32.partialorder %v264, %v886
    %vm928 = vcmp.gt.f32.partialorder %v270, %v886
    %vm929 = vcmp.gt.f32.partialorder %v276, %v886
    %vm930 = vcmp.gt.f32.partialorder %v282, %v886
    %vm931 = vcmp.gt.f32.partialorder %v288, %v886
    %vm932 = vcmp.gt.f32.partialorder %v294, %v886
    %vm933 = vcmp.gt.f32.partialorder %v301, %v887
    %vm934 = vcmp.gt.f32.partialorder %v307, %v887
    %vm935 = vcmp.gt.f32.partialorder %v313, %v887
    %vm936 = vcmp.gt.f32.partialorder %v319, %v887
    %vm937 = vcmp.gt.f32.partialorder %v325, %v887
    %vm938 = vcmp.gt.f32.partialorder %v331, %v887
    %vm939 = vcmp.gt.f32.partialorder %v337, %v887
    %vm940 = vcmp.gt.f32.partialorder %v343, %v887
    %vm941 = vcmp.gt.f32.partialorder %v349, %v887
    %vm942 = vcmp.gt.f32.partialorder %v355, %v887
    %vm943 = vcmp.gt.f32.partialorder %v361, %v887
    %vm944 = vcmp.gt.f32.partialorder %v367, %v887
    %vm945 = vcmp.gt.f32.partialorder %v373, %v887
    %vm946 = vcmp.gt.f32.partialorder %v379, %v887
    %vm947 = vcmp.gt.f32.partialorder %v385, %v887
    %vm948 = vcmp.gt.f32.partialorder %v391, %v887
    %vm949 = vcmp.gt.f32.partialorder %v398, %v888
    %vm950 = vcmp.gt.f32.partialorder %v404, %v888
    %vm951 = vcmp.gt.f32.partialorder %v410, %v888
    %vm952 = vcmp.gt.f32.partialorder %v416, %v888
    %vm953 = vcmp.gt.f32.partialorder %v422, %v888
    %vm954 = vcmp.gt.f32.partialorder %v428, %v888
    %vm955 = vcmp.gt.f32.partialorder %v434, %v888
    %vm956 = vcmp.gt.f32.partialorder %v440, %v888
    %vm957 = vcmp.gt.f32.partialorder %v446, %v888
    %vm958 = vcmp.gt.f32.partialorder %v452, %v888
    %vm959 = vcmp.gt.f32.partialorder %v458, %v888
    %vm960 = vcmp.gt.f32.partialorder %v464, %v888
    %vm961 = vcmp.gt.f32.partialorder %v470, %v888
    %vm962 = vcmp.gt.f32.partialorder %v476, %v888
    %vm963 = vcmp.gt.f32.partialorder %v482, %v888
    %vm964 = vcmp.gt.f32.partialorder %v488, %v888
    %vm965 = vcmp.gt.f32.partialorder %v495, %v889
    %vm966 = vcmp.gt.f32.partialorder %v501, %v889
    %vm967 = vcmp.gt.f32.partialorder %v507, %v889
    %vm968 = vcmp.gt.f32.partialorder %v513, %v889
    %vm969 = vcmp.gt.f32.partialorder %v519, %v889
    %vm970 = vcmp.gt.f32.partialorder %v525, %v889
    %vm971 = vcmp.gt.f32.partialorder %v531, %v889
    %vm972 = vcmp.gt.f32.partialorder %v537, %v889
    %vm973 = vcmp.gt.f32.partialorder %v543, %v889
    %vm974 = vcmp.gt.f32.partialorder %v549, %v889
    %vm975 = vcmp.gt.f32.partialorder %v555, %v889
    %vm976 = vcmp.gt.f32.partialorder %v561, %v889
    %vm977 = vcmp.gt.f32.partialorder %v567, %v889
    %vm978 = vcmp.gt.f32.partialorder %v573, %v889
    %vm979 = vcmp.gt.f32.partialorder %v579, %v889
    %vm980 = vcmp.gt.f32.partialorder %v585, %v889
    %vm981 = vcmp.gt.f32.partialorder %v592, %v890
    %vm982 = vcmp.gt.f32.partialorder %v598, %v890
    %vm983 = vcmp.gt.f32.partialorder %v604, %v890
    %vm984 = vcmp.gt.f32.partialorder %v610, %v890
    %vm985 = vcmp.gt.f32.partialorder %v616, %v890
    %vm986 = vcmp.gt.f32.partialorder %v622, %v890
    %vm987 = vcmp.gt.f32.partialorder %v628, %v890
    %vm988 = vcmp.gt.f32.partialorder %v634, %v890
    %vm989 = vcmp.gt.f32.partialorder %v640, %v890
    %vm990 = vcmp.gt.f32.partialorder %v646, %v890
    %vm991 = vcmp.gt.f32.partialorder %v652, %v890
    %vm992 = vcmp.gt.f32.partialorder %v658, %v890
    %vm993 = vcmp.gt.f32.partialorder %v664, %v890
    %vm994 = vcmp.gt.f32.partialorder %v670, %v890
    %vm995 = vcmp.gt.f32.partialorder %v676, %v890
    %vm996 = vcmp.gt.f32.partialorder %v682, %v890
    %vm997 = vcmp.gt.f32.partialorder %v689, %v891
    %vm998 = vcmp.gt.f32.partialorder %v695, %v891
    %vm999 = vcmp.gt.f32.partialorder %v701, %v891
    %vm1000 = vcmp.gt.f32.partialorder %v707, %v891
    %vm1001 = vcmp.gt.f32.partialorder %v713, %v891
    %vm1002 = vcmp.gt.f32.partialorder %v719, %v891
    %vm1003 = vcmp.gt.f32.partialorder %v725, %v891
    %vm1004 = vcmp.gt.f32.partialorder %v731, %v891
    %vm1005 = vcmp.gt.f32.partialorder %v737, %v891
    %vm1006 = vcmp.gt.f32.partialorder %v743, %v891
    %vm1007 = vcmp.gt.f32.partialorder %v749, %v891
    %vm1008 = vcmp.gt.f32.partialorder %v755, %v891
    %vm1009 = vcmp.gt.f32.partialorder %v761, %v891
    %vm1010 = vcmp.gt.f32.partialorder %v767, %v891
    %vm1011 = vcmp.gt.f32.partialorder %v773, %v891
    %vm1012 = vcmp.gt.f32.partialorder %v779, %v891
    %vm1013 = vcmp.gt.f32.partialorder %v786, %v892
    %vm1014 = vcmp.gt.f32.partialorder %v792, %v892
    %vm1015 = vcmp.gt.f32.partialorder %v798, %v892
    %vm1016 = vcmp.gt.f32.partialorder %v804, %v892
    %vm1017 = vcmp.gt.f32.partialorder %v810, %v892
    %vm1018 = vcmp.gt.f32.partialorder %v816, %v892
    %vm1019 = vcmp.gt.f32.partialorder %v822, %v892
    %vm1020 = vcmp.gt.f32.partialorder %v828, %v892
    %vm1021 = vcmp.gt.f32.partialorder %v834, %v892
    %vm1022 = vcmp.gt.f32.partialorder %v840, %v892
    %vm1023 = vcmp.gt.f32.partialorder %v846, %v892
    %vm1024 = vcmp.gt.f32.partialorder %v852, %v892
    %vm1025 = vcmp.gt.f32.partialorder %v858, %v892
    %vm1026 = vcmp.gt.f32.partialorder %v864, %v892
    %vm1027 = vcmp.gt.f32.partialorder %v870, %v892
    %vm1028 = vcmp.gt.f32.partialorder %v876, %v892
    %v1029 = vsel %vm901, 1, 0
    %v1030 = vsel %vm902, 1, 0
    %v1031 = vsel %vm903, 1, 0
    %v1032 = vsel %vm904, 1, 0
    %v1033 = vsel %vm905, 1, 0
    %v1034 = vsel %vm906, 1, 0
    %v1035 = vsel %vm907, 1, 0
    %v1036 = vsel %vm908, 1, 0
    %v1037 = vsel %vm909, 1, 0
    %v1038 = vsel %vm910, 1, 0
    %v1039 = vsel %vm911, 1, 0
    %v1040 = vsel %vm912, 1, 0
    %v1041 = vsel %vm913, 1, 0
    %v1042 = vsel %vm914, 1, 0
    %v1043 = vsel %vm915, 1, 0
    %v1044 = vsel %vm916, 1, 0
    %v1045 = vsel %vm917, 1, 0
    %v1046 = vsel %vm918, 1, 0
    %v1047 = vsel %vm919, 1, 0
    %v1048 = vsel %vm920, 1, 0
    %v1049 = vsel %vm921, 1, 0
    %v1050 = vsel %vm922, 1, 0
    %v1051 = vsel %vm923, 1, 0
    %v1052 = vsel %vm924, 1, 0
    %v1053 = vsel %vm925, 1, 0
    %v1054 = vsel %vm926, 1, 0
    %v1055 = vsel %vm927, 1, 0
    %v1056 = vsel %vm928, 1, 0
    %v1057 = vsel %vm929, 1, 0
    %v1058 = vsel %vm930, 1, 0
    %v1059 = vsel %vm931, 1, 0
    %v1060 = vsel %vm932, 1, 0
    %v1061 = vsel %vm933, 1, 0
    %v1062 = vsel %vm934, 1, 0
    %v1063 = vsel %vm935, 1, 0
    %v1064 = vsel %vm936, 1, 0
    %v1065 = vsel %vm937, 1, 0
    %v1066 = vsel %vm938, 1, 0
    %v1067 = vsel %vm939, 1, 0
    %v1068 = vsel %vm940, 1, 0
    %v1069 = vsel %vm941, 1, 0
    %v1070 = vsel %vm942, 1, 0
    %v1071 = vsel %vm943, 1, 0
    %v1072 = vsel %vm944, 1, 0
    %v1073 = vsel %vm945, 1, 0
    %v1074 = vsel %vm946, 1, 0
    %v1075 = vsel %vm947, 1, 0
    %v1076 = vsel %vm948, 1, 0
    %v1077 = vsel %vm949, 1, 0
    %v1078 = vsel %vm950, 1, 0
    %v1079 = vsel %vm951, 1, 0
    %v1080 = vsel %vm952, 1, 0
    %v1081 = vsel %vm953, 1, 0
    %v1082 = vsel %vm954, 1, 0
    %v1083 = vsel %vm955, 1, 0
    %v1084 = vsel %vm956, 1, 0
    %v1085 = vsel %vm957, 1, 0
    %v1086 = vsel %vm958, 1, 0
    %v1087 = vsel %vm959, 1, 0
    %v1088 = vsel %vm960, 1, 0
    %v1089 = vsel %vm961, 1, 0
    %v1090 = vsel %vm962, 1, 0
    %v1091 = vsel %vm963, 1, 0
    %v1092 = vsel %vm964, 1, 0
    %v1093 = vsel %vm965, 1, 0
    %v1094 = vsel %vm966, 1, 0
    %v1095 = vsel %vm967, 1, 0
    %v1096 = vsel %vm968, 1, 0
    %v1097 = vsel %vm969, 1, 0
    %v1098 = vsel %vm970, 1, 0
    %v1099 = vsel %vm971, 1, 0
    %v1100 = vsel %vm972, 1, 0
    %v1101 = vsel %vm973, 1, 0
    %v1102 = vsel %vm974, 1, 0
    %v1103 = vsel %vm975, 1, 0
    %v1104 = vsel %vm976, 1, 0
    %v1105 = vsel %vm977, 1, 0
    %v1106 = vsel %vm978, 1, 0
    %v1107 = vsel %vm979, 1, 0
    %v1108 = vsel %vm980, 1, 0
    %v1109 = vsel %vm981, 1, 0
    %v1110 = vsel %vm982, 1, 0
    %v1111 = vsel %vm983, 1, 0
    %v1112 = vsel %vm984, 1, 0
    %v1113 = vsel %vm985, 1, 0
    %v1114 = vsel %vm986, 1, 0
    %v1115 = vsel %vm987, 1, 0
    %v1116 = vsel %vm988, 1, 0
    %v1117 = vsel %vm989, 1, 0
    %v1118 = vsel %vm990, 1, 0
    %v1119 = vsel %vm991, 1, 0
    %v1120 = vsel %vm992, 1, 0
    %v1121 = vsel %vm993, 1, 0
    %v1122 = vsel %vm994, 1, 0
    %v1123 = vsel %vm995, 1, 0
    %v1124 = vsel %vm996, 1, 0
    %v1125 = vsel %vm997, 1, 0
    %v1126 = vsel %vm998, 1, 0
    %v1127 = vsel %vm999, 1, 0
    %v1128 = vsel %vm1000, 1, 0
    %v1129 = vsel %vm1001, 1, 0
    %v1130 = vsel %vm1002, 1, 0
    %v1131 = vsel %vm1003, 1, 0
    %v1132 = vsel %vm1004, 1, 0
    %v1133 = vsel %vm1005, 1, 0
    %v1134 = vsel %vm1006, 1, 0
    %v1135 = vsel %vm1007, 1, 0
    %v1136 = vsel %vm1008, 1, 0
    %v1137 = vsel %vm1009, 1, 0
    %v1138 = vsel %vm1010, 1, 0
    %v1139 = vsel %vm1011, 1, 0
    %v1140 = vsel %vm1012, 1, 0
    %v1141 = vsel %vm1013, 1, 0
    %v1142 = vsel %vm1014, 1, 0
    %v1143 = vsel %vm1015, 1, 0
    %v1144 = vsel %vm1016, 1, 0
    %v1145 = vsel %vm1017, 1, 0
    %v1146 = vsel %vm1018, 1, 0
    %v1147 = vsel %vm1019, 1, 0
    %v1148 = vsel %vm1020, 1, 0
    %v1149 = vsel %vm1021, 1, 0
    %v1150 = vsel %vm1022, 1, 0
    %v1151 = vsel %vm1023, 1, 0
    %v1152 = vsel %vm1024, 1, 0
    %v1153 = vsel %vm1025, 1, 0
    %v1154 = vsel %vm1026, 1, 0
    %v1155 = vsel %vm1027, 1, 0
    %v1156 = vsel %vm1028, 1, 0
    %v1157 = vcvt.s32.f32 %v1029
    %v1158 = vcvt.s32.f32 %v1030
    %v1159 = vcvt.s32.f32 %v1031
    %v1160 = vcvt.s32.f32 %v1032
    %v1161 = vcvt.s32.f32 %v1033
    %v1162 = vcvt.s32.f32 %v1034
    %v1163 = vcvt.s32.f32 %v1035
    %v1164 = vcvt.s32.f32 %v1036
    %v1165 = vcvt.s32.f32 %v1037
    %v1166 = vcvt.s32.f32 %v1038
    %v1167 = vcvt.s32.f32 %v1039
    %v1168 = vcvt.s32.f32 %v1040
    %v1169 = vcvt.s32.f32 %v1041
    %v1170 = vcvt.s32.f32 %v1042
    %v1171 = vcvt.s32.f32 %v1043
    %v1172 = vcvt.s32.f32 %v1044
    %v1173 = vcvt.s32.f32 %v1045
    %v1174 = vcvt.s32.f32 %v1046
    %v1175 = vcvt.s32.f32 %v1047
    %v1176 = vcvt.s32.f32 %v1048
    %v1177 = vcvt.s32.f32 %v1049
    %v1178 = vcvt.s32.f32 %v1050
    %v1179 = vcvt.s32.f32 %v1051
    %v1180 = vcvt.s32.f32 %v1052
    %v1181 = vcvt.s32.f32 %v1053
    %v1182 = vcvt.s32.f32 %v1054
    %v1183 = vcvt.s32.f32 %v1055
    %v1184 = vcvt.s32.f32 %v1056
    %v1185 = vcvt.s32.f32 %v1057
    %v1186 = vcvt.s32.f32 %v1058
    %v1187 = vcvt.s32.f32 %v1059
    %v1188 = vcvt.s32.f32 %v1060
    %v1189 = vcvt.s32.f32 %v1061
    %v1190 = vcvt.s32.f32 %v1062
    %v1191 = vcvt.s32.f32 %v1063
    %v1192 = vcvt.s32.f32 %v1064
    %v1193 = vcvt.s32.f32 %v1065
    %v1194 = vcvt.s32.f32 %v1066
    %v1195 = vcvt.s32.f32 %v1067
    %v1196 = vcvt.s32.f32 %v1068
    %v1197 = vcvt.s32.f32 %v1069
    %v1198 = vcvt.s32.f32 %v1070
    %v1199 = vcvt.s32.f32 %v1071
    %v1200 = vcvt.s32.f32 %v1072
    %v1201 = vcvt.s32.f32 %v1073
    %v1202 = vcvt.s32.f32 %v1074
    %v1203 = vcvt.s32.f32 %v1075
    %v1204 = vcvt.s32.f32 %v1076
    %v1205 = vcvt.s32.f32 %v1077
    %v1206 = vcvt.s32.f32 %v1078
    %v1207 = vcvt.s32.f32 %v1079
    %v1208 = vcvt.s32.f32 %v1080
    %v1209 = vcvt.s32.f32 %v1081
    %v1210 = vcvt.s32.f32 %v1082
    %v1211 = vcvt.s32.f32 %v1083
    %v1212 = vcvt.s32.f32 %v1084
    %v1213 = vcvt.s32.f32 %v1085
    %v1214 = vcvt.s32.f32 %v1086
    %v1215 = vcvt.s32.f32 %v1087
    %v1216 = vcvt.s32.f32 %v1088
    %v1217 = vcvt.s32.f32 %v1089
    %v1218 = vcvt.s32.f32 %v1090
    %v1219 = vcvt.s32.f32 %v1091
    %v1220 = vcvt.s32.f32 %v1092
    %v1221 = vcvt.s32.f32 %v1093
    %v1222 = vcvt.s32.f32 %v1094
    %v1223 = vcvt.s32.f32 %v1095
    %v1224 = vcvt.s32.f32 %v1096
    %v1225 = vcvt.s32.f32 %v1097
    %v1226 = vcvt.s32.f32 %v1098
    %v1227 = vcvt.s32.f32 %v1099
    %v1228 = vcvt.s32.f32 %v1100
    %v1229 = vcvt.s32.f32 %v1101
    %v1230 = vcvt.s32.f32 %v1102
    %v1231 = vcvt.s32.f32 %v1103
    %v1232 = vcvt.s32.f32 %v1104
    %v1233 = vcvt.s32.f32 %v1105
    %v1234 = vcvt.s32.f32 %v1106
    %v1235 = vcvt.s32.f32 %v1107
    %v1236 = vcvt.s32.f32 %v1108
    %v1237 = vcvt.s32.f32 %v1109
    %v1238 = vcvt.s32.f32 %v1110
    %v1239 = vcvt.s32.f32 %v1111
    %v1240 = vcvt.s32.f32 %v1112
    %v1241 = vcvt.s32.f32 %v1113
    %v1242 = vcvt.s32.f32 %v1114
    %v1243 = vcvt.s32.f32 %v1115
    %v1244 = vcvt.s32.f32 %v1116
    %v1245 = vcvt.s32.f32 %v1117
    %v1246 = vcvt.s32.f32 %v1118
    %v1247 = vcvt.s32.f32 %v1119
    %v1248 = vcvt.s32.f32 %v1120
    %v1249 = vcvt.s32.f32 %v1121
    %v1250 = vcvt.s32.f32 %v1122
    %v1251 = vcvt.s32.f32 %v1123
    %v1252 = vcvt.s32.f32 %v1124
    %v1253 = vcvt.s32.f32 %v1125
    %v1254 = vcvt.s32.f32 %v1126
    %v1255 = vcvt.s32.f32 %v1127
    %v1256 = vcvt.s32.f32 %v1128
    %v1257 = vcvt.s32.f32 %v1129
    %v1258 = vcvt.s32.f32 %v1130
    %v1259 = vcvt.s32.f32 %v1131
    %v1260 = vcvt.s32.f32 %v1132
    %v1261 = vcvt.s32.f32 %v1133
    %v1262 = vcvt.s32.f32 %v1134
    %v1263 = vcvt.s32.f32 %v1135
    %v1264 = vcvt.s32.f32 %v1136
    %v1265 = vcvt.s32.f32 %v1137
    %v1266 = vcvt.s32.f32 %v1138
    %v1267 = vcvt.s32.f32 %v1139
    %v1268 = vcvt.s32.f32 %v1140
    %v1269 = vcvt.s32.f32 %v1141
    %v1270 = vcvt.s32.f32 %v1142
    %v1271 = vcvt.s32.f32 %v1143
    %v1272 = vcvt.s32.f32 %v1144
    %v1273 = vcvt.s32.f32 %v1145
    %v1274 = vcvt.s32.f32 %v1146
    %v1275 = vcvt.s32.f32 %v1147
    %v1276 = vcvt.s32.f32 %v1148
    %v1277 = vcvt.s32.f32 %v1149
    %v1278 = vcvt.s32.f32 %v1150
    %v1279 = vcvt.s32.f32 %v1151
    %v1280 = vcvt.s32.f32 %v1152
    %v1281 = vcvt.s32.f32 %v1153
    %v1282 = vcvt.s32.f32 %v1154
    %v1283 = vcvt.s32.f32 %v1155
    %v1284 = vcvt.s32.f32 %v1156
    %1285 = vadd.xlane.f32.xlu0 %v1157
    %v1286 = vpop.xlane.xlu0 %1285
    %1287 = vadd.xlane.f32.xlu0 %v1158
    %v1288 = vpop.xlane.xlu0 %1287
    %1289 = vadd.xlane.f32.xlu0 %v1159
    %v1290 = vpop.xlane.xlu0 %1289
    %1291 = vadd.xlane.f32.xlu0 %v1160
    %v1292 = vpop.xlane.xlu0 %1291
    %1293 = vadd.xlane.f32.xlu0 %v1161
    %v1294 = vpop.xlane.xlu0 %1293
    %1295 = vadd.xlane.f32.xlu0 %v1162
    %v1296 = vpop.xlane.xlu0 %1295
    %1297 = vadd.xlane.f32.xlu0 %v1163
    %v1298 = vpop.xlane.xlu0 %1297
    %1299 = vadd.xlane.f32.xlu0 %v1164
    %v1300 = vpop.xlane.xlu0 %1299
    %1301 = vadd.xlane.f32.xlu0 %v1165
    %v1302 = vpop.xlane.xlu0 %1301
    %1303 = vadd.xlane.f32.xlu0 %v1166
    %v1304 = vpop.xlane.xlu0 %1303
    %1305 = vadd.xlane.f32.xlu0 %v1167
    %v1306 = vpop.xlane.xlu0 %1305
    %1307 = vadd.xlane.f32.xlu0 %v1168
    %v1308 = vpop.xlane.xlu0 %1307
    %1309 = vadd.xlane.f32.xlu0 %v1169
    %v1310 = vpop.xlane.xlu0 %1309
    %1311 = vadd.xlane.f32.xlu0 %v1170
    %v1312 = vpop.xlane.xlu0 %1311
    %1313 = vadd.xlane.f32.xlu0 %v1171
    %v1314 = vpop.xlane.xlu0 %1313
    %1315 = vadd.xlane.f32.xlu0 %v1172
    %v1316 = vpop.xlane.xlu0 %1315
    %1317 = vadd.xlane.f32.xlu0 %v1173
    %v1318 = vpop.xlane.xlu0 %1317
    %1319 = vadd.xlane.f32.xlu0 %v1174
    %v1320 = vpop.xlane.xlu0 %1319
    %1321 = vadd.xlane.f32.xlu0 %v1175
    %v1322 = vpop.xlane.xlu0 %1321
    %1323 = vadd.xlane.f32.xlu0 %v1176
    %v1324 = vpop.xlane.xlu0 %1323
    %1325 = vadd.xlane.f32.xlu0 %v1177
    %v1326 = vpop.xlane.xlu0 %1325
    %1327 = vadd.xlane.f32.xlu0 %v1178
    %v1328 = vpop.xlane.xlu0 %1327
    %1329 = vadd.xlane.f32.xlu0 %v1179
    %v1330 = vpop.xlane.xlu0 %1329
    %1331 = vadd.xlane.f32.xlu0 %v1180
    %v1332 = vpop.xlane.xlu0 %1331
    %1333 = vadd.xlane.f32.xlu0 %v1181
    %v1334 = vpop.xlane.xlu0 %1333
    %1335 = vadd.xlane.f32.xlu0 %v1182
    %v1336 = vpop.xlane.xlu0 %1335
    %1337 = vadd.xlane.f32.xlu0 %v1183
    %v1338 = vpop.xlane.xlu0 %1337
    %1339 = vadd.xlane.f32.xlu0 %v1184
    %v1340 = vpop.xlane.xlu0 %1339
    %1341 = vadd.xlane.f32.xlu0 %v1185
    %v1342 = vpop.xlane.xlu0 %1341
    %1343 = vadd.xlane.f32.xlu0 %v1186
    %v1344 = vpop.xlane.xlu0 %1343
    %1345 = vadd.xlane.f32.xlu0 %v1187
    %v1346 = vpop.xlane.xlu0 %1345
    %1347 = vadd.xlane.f32.xlu0 %v1188
    %v1348 = vpop.xlane.xlu0 %1347
    %1349 = vadd.xlane.f32.xlu0 %v1189
    %v1350 = vpop.xlane.xlu0 %1349
    %1351 = vadd.xlane.f32.xlu0 %v1190
    %v1352 = vpop.xlane.xlu0 %1351
    %1353 = vadd.xlane.f32.xlu0 %v1191
    %v1354 = vpop.xlane.xlu0 %1353
    %1355 = vadd.xlane.f32.xlu0 %v1192
    %v1356 = vpop.xlane.xlu0 %1355
    %1357 = vadd.xlane.f32.xlu0 %v1193
    %v1358 = vpop.xlane.xlu0 %1357
    %1359 = vadd.xlane.f32.xlu0 %v1194
    %v1360 = vpop.xlane.xlu0 %1359
    %1361 = vadd.xlane.f32.xlu0 %v1195
    %v1362 = vpop.xlane.xlu0 %1361
    %1363 = vadd.xlane.f32.xlu0 %v1196
    %v1364 = vpop.xlane.xlu0 %1363
    %1365 = vadd.xlane.f32.xlu0 %v1197
    %v1366 = vpop.xlane.xlu0 %1365
    %1367 = vadd.xlane.f32.xlu0 %v1198
    %v1368 = vpop.xlane.xlu0 %1367
    %1369 = vadd.xlane.f32.xlu0 %v1199
    %v1370 = vpop.xlane.xlu0 %1369
    %1371 = vadd.xlane.f32.xlu0 %v1200
    %v1372 = vpop.xlane.xlu0 %1371
    %1373 = vadd.xlane.f32.xlu0 %v1201
    %v1374 = vpop.xlane.xlu0 %1373
    %1375 = vadd.xlane.f32.xlu0 %v1202
    %v1376 = vpop.xlane.xlu0 %1375
    %1377 = vadd.xlane.f32.xlu0 %v1203
    %v1378 = vpop.xlane.xlu0 %1377
    %1379 = vadd.xlane.f32.xlu0 %v1204
    %v1380 = vpop.xlane.xlu0 %1379
    %1381 = vadd.xlane.f32.xlu0 %v1205
    %v1382 = vpop.xlane.xlu0 %1381
    %1383 = vadd.xlane.f32.xlu0 %v1206
    %v1384 = vpop.xlane.xlu0 %1383
    %1385 = vadd.xlane.f32.xlu0 %v1207
    %v1386 = vpop.xlane.xlu0 %1385
    %1387 = vadd.xlane.f32.xlu0 %v1208
    %v1388 = vpop.xlane.xlu0 %1387
    %1389 = vadd.xlane.f32.xlu0 %v1209
    %v1390 = vpop.xlane.xlu0 %1389
    %1391 = vadd.xlane.f32.xlu0 %v1210
    %v1392 = vpop.xlane.xlu0 %1391
    %1393 = vadd.xlane.f32.xlu0 %v1211
    %v1394 = vpop.xlane.xlu0 %1393
    %1395 = vadd.xlane.f32.xlu0 %v1212
    %v1396 = vpop.xlane.xlu0 %1395
    %1397 = vadd.xlane.f32.xlu0 %v1213
    %v1398 = vpop.xlane.xlu0 %1397
    %1399 = vadd.xlane.f32.xlu0 %v1214
    %v1400 = vpop.xlane.xlu0 %1399
    %1401 = vadd.xlane.f32.xlu0 %v1215
    %v1402 = vpop.xlane.xlu0 %1401
    %1403 = vadd.xlane.f32.xlu0 %v1216
    %v1404 = vpop.xlane.xlu0 %1403
    %1405 = vadd.xlane.f32.xlu0 %v1217
    %v1406 = vpop.xlane.xlu0 %1405
    %1407 = vadd.xlane.f32.xlu0 %v1218
    %v1408 = vpop.xlane.xlu0 %1407
    %1409 = vadd.xlane.f32.xlu0 %v1219
    %v1410 = vpop.xlane.xlu0 %1409
    %1411 = vadd.xlane.f32.xlu0 %v1220
    %v1412 = vpop.xlane.xlu0 %1411
    %1413 = vadd.xlane.f32.xlu0 %v1221
    %v1414 = vpop.xlane.xlu0 %1413
    %1415 = vadd.xlane.f32.xlu0 %v1222
    %v1416 = vpop.xlane.xlu0 %1415
    %1417 = vadd.xlane.f32.xlu0 %v1223
    %v1418 = vpop.xlane.xlu0 %1417
    %1419 = vadd.xlane.f32.xlu0 %v1224
    %v1420 = vpop.xlane.xlu0 %1419
    %1421 = vadd.xlane.f32.xlu0 %v1225
    %v1422 = vpop.xlane.xlu0 %1421
    %1423 = vadd.xlane.f32.xlu0 %v1226
    %v1424 = vpop.xlane.xlu0 %1423
    %1425 = vadd.xlane.f32.xlu0 %v1227
    %v1426 = vpop.xlane.xlu0 %1425
    %1427 = vadd.xlane.f32.xlu0 %v1228
    %v1428 = vpop.xlane.xlu0 %1427
    %1429 = vadd.xlane.f32.xlu0 %v1229
    %v1430 = vpop.xlane.xlu0 %1429
    %1431 = vadd.xlane.f32.xlu0 %v1230
    %v1432 = vpop.xlane.xlu0 %1431
    %1433 = vadd.xlane.f32.xlu0 %v1231
    %v1434 = vpop.xlane.xlu0 %1433
    %1435 = vadd.xlane.f32.xlu0 %v1232
    %v1436 = vpop.xlane.xlu0 %1435
    %1437 = vadd.xlane.f32.xlu0 %v1233
    %v1438 = vpop.xlane.xlu0 %1437
    %1439 = vadd.xlane.f32.xlu0 %v1234
    %v1440 = vpop.xlane.xlu0 %1439
    %1441 = vadd.xlane.f32.xlu0 %v1235
    %v1442 = vpop.xlane.xlu0 %1441
    %1443 = vadd.xlane.f32.xlu0 %v1236
    %v1444 = vpop.xlane.xlu0 %1443
    %1445 = vadd.xlane.f32.xlu0 %v1237
    %v1446 = vpop.xlane.xlu0 %1445
    %1447 = vadd.xlane.f32.xlu0 %v1238
    %v1448 = vpop.xlane.xlu0 %1447
    %1449 = vadd.xlane.f32.xlu0 %v1239
    %v1450 = vpop.xlane.xlu0 %1449
    %1451 = vadd.xlane.f32.xlu0 %v1240
    %v1452 = vpop.xlane.xlu0 %1451
    %1453 = vadd.xlane.f32.xlu0 %v1241
    %v1454 = vpop.xlane.xlu0 %1453
    %1455 = vadd.xlane.f32.xlu0 %v1242
    %v1456 = vpop.xlane.xlu0 %1455
    %1457 = vadd.xlane.f32.xlu0 %v1243
    %v1458 = vpop.xlane.xlu0 %1457
    %1459 = vadd.xlane.f32.xlu0 %v1244
    %v1460 = vpop.xlane.xlu0 %1459
    %1461 = vadd.xlane.f32.xlu0 %v1245
    %v1462 = vpop.xlane.xlu0 %1461
    %1463 = vadd.xlane.f32.xlu0 %v1246
    %v1464 = vpop.xlane.xlu0 %1463
    %1465 = vadd.xlane.f32.xlu0 %v1247
    %v1466 = vpop.xlane.xlu0 %1465
    %1467 = vadd.xlane.f32.xlu0 %v1248
    %v1468 = vpop.xlane.xlu0 %1467
    %1469 = vadd.xlane.f32.xlu0 %v1249
    %v1470 = vpop.xlane.xlu0 %1469
    %1471 = vadd.xlane.f32.xlu0 %v1250
    %v1472 = vpop.xlane.xlu0 %1471
    %1473 = vadd.xlane.f32.xlu0 %v1251
    %v1474 = vpop.xlane.xlu0 %1473
    %1475 = vadd.xlane.f32.xlu0 %v1252
    %v1476 = vpop.xlane.xlu0 %1475
    %1477 = vadd.xlane.f32.xlu0 %v1253
    %v1478 = vpop.xlane.xlu0 %1477
    %1479 = vadd.xlane.f32.xlu0 %v1254
    %v1480 = vpop.xlane.xlu0 %1479
    %1481 = vadd.xlane.f32.xlu0 %v1255
    %v1482 = vpop.xlane.xlu0 %1481
    %1483 = vadd.xlane.f32.xlu0 %v1256
    %v1484 = vpop.xlane.xlu0 %1483
    %1485 = vadd.xlane.f32.xlu0 %v1257
    %v1486 = vpop.xlane.xlu0 %1485
    %1487 = vadd.xlane.f32.xlu0 %v1258
    %v1488 = vpop.xlane.xlu0 %1487
    %1489 = vadd.xlane.f32.xlu0 %v1259
    %v1490 = vpop.xlane.xlu0 %1489
    %1491 = vadd.xlane.f32.xlu0 %v1260
    %v1492 = vpop.xlane.xlu0 %1491
    %1493 = vadd.xlane.f32.xlu0 %v1261
    %v1494 = vpop.xlane.xlu0 %1493
    %1495 = vadd.xlane.f32.xlu0 %v1262
    %v1496 = vpop.xlane.xlu0 %1495
    %1497 = vadd.xlane.f32.xlu0 %v1263
    %v1498 = vpop.xlane.xlu0 %1497
    %1499 = vadd.xlane.f32.xlu0 %v1264
    %v1500 = vpop.xlane.xlu0 %1499
    %1501 = vadd.xlane.f32.xlu0 %v1265
    %v1502 = vpop.xlane.xlu0 %1501
    %1503 = vadd.xlane.f32.xlu0 %v1266
    %v1504 = vpop.xlane.xlu0 %1503
    %1505 = vadd.xlane.f32.xlu0 %v1267
    %v1506 = vpop.xlane.xlu0 %1505
    %1507 = vadd.xlane.f32.xlu0 %v1268
    %v1508 = vpop.xlane.xlu0 %1507
    %1509 = vadd.xlane.f32.xlu0 %v1269
    %v1510 = vpop.xlane.xlu0 %1509
    %1511 = vadd.xlane.f32.xlu0 %v1270
    %v1512 = vpop.xlane.xlu0 %1511
    %1513 = vadd.xlane.f32.xlu0 %v1271
    %v1514 = vpop.xlane.xlu0 %1513
    %1515 = vadd.xlane.f32.xlu0 %v1272
    %v1516 = vpop.xlane.xlu0 %1515
    %1517 = vadd.xlane.f32.xlu0 %v1273
    %v1518 = vpop.xlane.xlu0 %1517
    %1519 = vadd.xlane.f32.xlu0 %v1274
    %v1520 = vpop.xlane.xlu0 %1519
    %1521 = vadd.xlane.f32.xlu0 %v1275
    %v1522 = vpop.xlane.xlu0 %1521
    %1523 = vadd.xlane.f32.xlu0 %v1276
    %v1524 = vpop.xlane.xlu0 %1523
    %1525 = vadd.xlane.f32.xlu0 %v1277
    %v1526 = vpop.xlane.xlu0 %1525
    %1527 = vadd.xlane.f32.xlu0 %v1278
    %v1528 = vpop.xlane.xlu0 %1527
    %1529 = vadd.xlane.f32.xlu0 %v1279
    %v1530 = vpop.xlane.xlu0 %1529
    %1531 = vadd.xlane.f32.xlu0 %v1280
    %v1532 = vpop.xlane.xlu0 %1531
    %1533 = vadd.xlane.f32.xlu0 %v1281
    %v1534 = vpop.xlane.xlu0 %1533
    %1535 = vadd.xlane.f32.xlu0 %v1282
    %v1536 = vpop.xlane.xlu0 %1535
    %1537 = vadd.xlane.f32.xlu0 %v1283
    %v1538 = vpop.xlane.xlu0 %1537
    %1539 = vadd.xlane.f32.xlu0 %v1284
    %v1540 = vpop.xlane.xlu0 %1539
    %v1542 = vrot.slane %v84, 1
    %v1543 = vrot.slane %v84, 2
    %v1544 = vrot.slane %v84, 3
    %v1545 = vrot.slane %v84, 4
    %v1546 = vrot.slane %v84, 5
    %v1547 = vrot.slane %v84, 6
    %v1548 = vrot.slane %v84, 7
    %v1549 = vperm.slane %v84, 0
    %v1550 = vperm.slane %v1542, 0
    %v1551 = vperm.slane %v1543, 0
    %v1552 = vperm.slane %v1544, 0
    %v1553 = vperm.slane %v1545, 0
    %v1554 = vperm.slane %v1546, 0
    %v1555 = vperm.slane %v1547, 0
    %v1556 = vperm.slane %v1548, 0
    %v1565 = vmul.f32 %v1157, %v1549
    %v1566 = vmul.f32 %v1158, %v1549
    %v1567 = vmul.f32 %v1159, %v1549
    %v1568 = vmul.f32 %v1160, %v1549
    %v1569 = vmul.f32 %v1161, %v1549
    %v1570 = vmul.f32 %v1162, %v1549
    %v1571 = vmul.f32 %v1163, %v1549
    %v1572 = vmul.f32 %v1164, %v1549
    %v1573 = vmul.f32 %v1165, %v1549
    %v1574 = vmul.f32 %v1166, %v1549
    %v1575 = vmul.f32 %v1167, %v1549
    %v1576 = vmul.f32 %v1168, %v1549
    %v1577 = vmul.f32 %v1169, %v1549
    %v1578 = vmul.f32 %v1170, %v1549
    %v1579 = vmul.f32 %v1171, %v1549
    %v1580 = vmul.f32 %v1172, %v1549
    %v1581 = vmul.f32 %v1173, %v1550
    %v1582 = vmul.f32 %v1174, %v1550
    %v1583 = vmul.f32 %v1175, %v1550
    %v1584 = vmul.f32 %v1176, %v1550
    %v1585 = vmul.f32 %v1177, %v1550
    %v1586 = vmul.f32 %v1178, %v1550
    %v1587 = vmul.f32 %v1179, %v1550
    %v1588 = vmul.f32 %v1180, %v1550
    %v1589 = vmul.f32 %v1181, %v1550
    %v1590 = vmul.f32 %v1182, %v1550
    %v1591 = vmul.f32 %v1183, %v1550
    %v1592 = vmul.f32 %v1184, %v1550
    %v1593 = vmul.f32 %v1185, %v1550
    %v1594 = vmul.f32 %v1186, %v1550
    %v1595 = vmul.f32 %v1187, %v1550
    %v1596 = vmul.f32 %v1188, %v1550
    %v1597 = vmul.f32 %v1189, %v1551
    %v1598 = vmul.f32 %v1190, %v1551
    %v1599 = vmul.f32 %v1191, %v1551
    %v1600 = vmul.f32 %v1192, %v1551
    %v1601 = vmul.f32 %v1193, %v1551
    %v1602 = vmul.f32 %v1194, %v1551
    %v1603 = vmul.f32 %v1195, %v1551
    %v1604 = vmul.f32 %v1196, %v1551
    %v1605 = vmul.f32 %v1197, %v1551
    %v1606 = vmul.f32 %v1198, %v1551
    %v1607 = vmul.f32 %v1199, %v1551
    %v1608 = vmul.f32 %v1200, %v1551
    %v1609 = vmul.f32 %v1201, %v1551
    %v1610 = vmul.f32 %v1202, %v1551
    %v1611 = vmul.f32 %v1203, %v1551
    %v1612 = vmul.f32 %v1204, %v1551
    %v1613 = vmul.f32 %v1205, %v1552
    %v1614 = vmul.f32 %v1206, %v1552
    %v1615 = vmul.f32 %v1207, %v1552
    %v1616 = vmul.f32 %v1208, %v1552
    %v1617 = vmul.f32 %v1209, %v1552
    %v1618 = vmul.f32 %v1210, %v1552
    %v1619 = vmul.f32 %v1211, %v1552
    %v1620 = vmul.f32 %v1212, %v1552
    %v1621 = vmul.f32 %v1213, %v1552
    %v1622 = vmul.f32 %v1214, %v1552
    %v1623 = vmul.f32 %v1215, %v1552
    %v1624 = vmul.f32 %v1216, %v1552
    %v1625 = vmul.f32 %v1217, %v1552
    %v1626 = vmul.f32 %v1218, %v1552
    %v1627 = vmul.f32 %v1219, %v1552
    %v1628 = vmul.f32 %v1220, %v1552
    %v1629 = vmul.f32 %v1221, %v1553
    %v1630 = vmul.f32 %v1222, %v1553
    %v1631 = vmul.f32 %v1223, %v1553
    %v1632 = vmul.f32 %v1224, %v1553
    %v1633 = vmul.f32 %v1225, %v1553
    %v1634 = vmul.f32 %v1226, %v1553
    %v1635 = vmul.f32 %v1227, %v1553
    %v1636 = vmul.f32 %v1228, %v1553
    %v1637 = vmul.f32 %v1229, %v1553
    %v1638 = vmul.f32 %v1230, %v1553
    %v1639 = vmul.f32 %v1231, %v1553
    %v1640 = vmul.f32 %v1232, %v1553
    %v1641 = vmul.f32 %v1233, %v1553
    %v1642 = vmul.f32 %v1234, %v1553
    %v1643 = vmul.f32 %v1235, %v1553
    %v1644 = vmul.f32 %v1236, %v1553
    %v1645 = vmul.f32 %v1237, %v1554
    %v1646 = vmul.f32 %v1238, %v1554
    %v1647 = vmul.f32 %v1239, %v1554
    %v1648 = vmul.f32 %v1240, %v1554
    %v1649 = vmul.f32 %v1241, %v1554
    %v1650 = vmul.f32 %v1242, %v1554
    %v1651 = vmul.f32 %v1243, %v1554
    %v1652 = vmul.f32 %v1244, %v1554
    %v1653 = vmul.f32 %v1245, %v1554
    %v1654 = vmul.f32 %v1246, %v1554
    %v1655 = vmul.f32 %v1247, %v1554
    %v1656 = vmul.f32 %v1248, %v1554
    %v1657 = vmul.f32 %v1249, %v1554
    %v1658 = vmul.f32 %v1250, %v1554
    %v1659 = vmul.f32 %v1251, %v1554
    %v1660 = vmul.f32 %v1252, %v1554
    %v1661 = vmul.f32 %v1253, %v1555
    %v1662 = vmul.f32 %v1254, %v1555
    %v1663 = vmul.f32 %v1255, %v1555
    %v1664 = vmul.f32 %v1256, %v1555
    %v1665 = vmul.f32 %v1257, %v1555
    %v1666 = vmul.f32 %v1258, %v1555
    %v1667 = vmul.f32 %v1259, %v1555
    %v1668 = vmul.f32 %v1260, %v1555
    %v1669 = vmul.f32 %v1261, %v1555
    %v1670 = vmul.f32 %v1262, %v1555
    %v1671 = vmul.f32 %v1263, %v1555
    %v1672 = vmul.f32 %v1264, %v1555
    %v1673 = vmul.f32 %v1265, %v1555
    %v1674 = vmul.f32 %v1266, %v1555
    %v1675 = vmul.f32 %v1267, %v1555
    %v1676 = vmul.f32 %v1268, %v1555
    %v1677 = vmul.f32 %v1269, %v1556
    %v1678 = vmul.f32 %v1270, %v1556
    %v1679 = vmul.f32 %v1271, %v1556
    %v1680 = vmul.f32 %v1272, %v1556
    %v1681 = vmul.f32 %v1273, %v1556
    %v1682 = vmul.f32 %v1274, %v1556
    %v1683 = vmul.f32 %v1275, %v1556
    %v1684 = vmul.f32 %v1276, %v1556
    %v1685 = vmul.f32 %v1277, %v1556
    %v1686 = vmul.f32 %v1278, %v1556
    %v1687 = vmul.f32 %v1279, %v1556
    %v1688 = vmul.f32 %v1280, %v1556
    %v1689 = vmul.f32 %v1281, %v1556
    %v1690 = vmul.f32 %v1282, %v1556
    %v1691 = vmul.f32 %v1283, %v1556
    %v1692 = vmul.f32 %v1284, %v1556
    %1693 = vadd.xlane.f32.xlu0 %v1565
    %v1694 = vpop.xlane.xlu0 %1693
    %1695 = vadd.xlane.f32.xlu0 %v1566
    %v1696 = vpop.xlane.xlu0 %1695
    %1697 = vadd.xlane.f32.xlu0 %v1567
    %v1698 = vpop.xlane.xlu0 %1697
    %1699 = vadd.xlane.f32.xlu0 %v1568
    %v1700 = vpop.xlane.xlu0 %1699
    %1701 = vadd.xlane.f32.xlu0 %v1569
    %v1702 = vpop.xlane.xlu0 %1701
    %1703 = vadd.xlane.f32.xlu0 %v1570
    %v1704 = vpop.xlane.xlu0 %1703
    %1705 = vadd.xlane.f32.xlu0 %v1571
    %v1706 = vpop.xlane.xlu0 %1705
    %1707 = vadd.xlane.f32.xlu0 %v1572
    %v1708 = vpop.xlane.xlu0 %1707
    %1709 = vadd.xlane.f32.xlu0 %v1573
    %v1710 = vpop.xlane.xlu0 %1709
    %1711 = vadd.xlane.f32.xlu0 %v1574
    %v1712 = vpop.xlane.xlu0 %1711
    %1713 = vadd.xlane.f32.xlu0 %v1575
    %v1714 = vpop.xlane.xlu0 %1713
    %1715 = vadd.xlane.f32.xlu0 %v1576
    %v1716 = vpop.xlane.xlu0 %1715
    %1717 = vadd.xlane.f32.xlu0 %v1577
    %v1718 = vpop.xlane.xlu0 %1717
    %1719 = vadd.xlane.f32.xlu0 %v1578
    %v1720 = vpop.xlane.xlu0 %1719
    %1721 = vadd.xlane.f32.xlu0 %v1579
    %v1722 = vpop.xlane.xlu0 %1721
    %1723 = vadd.xlane.f32.xlu0 %v1580
    %v1724 = vpop.xlane.xlu0 %1723
    %1725 = vadd.xlane.f32.xlu0 %v1581
    %v1726 = vpop.xlane.xlu0 %1725
    %1727 = vadd.xlane.f32.xlu0 %v1582
    %v1728 = vpop.xlane.xlu0 %1727
    %1729 = vadd.xlane.f32.xlu0 %v1583
    %v1730 = vpop.xlane.xlu0 %1729
    %1731 = vadd.xlane.f32.xlu0 %v1584
    %v1732 = vpop.xlane.xlu0 %1731
    %1733 = vadd.xlane.f32.xlu0 %v1585
    %v1734 = vpop.xlane.xlu0 %1733
    %1735 = vadd.xlane.f32.xlu0 %v1586
    %v1736 = vpop.xlane.xlu0 %1735
    %1737 = vadd.xlane.f32.xlu0 %v1587
    %v1738 = vpop.xlane.xlu0 %1737
    %1739 = vadd.xlane.f32.xlu0 %v1588
    %v1740 = vpop.xlane.xlu0 %1739
    %1741 = vadd.xlane.f32.xlu0 %v1589
    %v1742 = vpop.xlane.xlu0 %1741
    %1743 = vadd.xlane.f32.xlu0 %v1590
    %v1744 = vpop.xlane.xlu0 %1743
    %1745 = vadd.xlane.f32.xlu0 %v1591
    %v1746 = vpop.xlane.xlu0 %1745
    %1747 = vadd.xlane.f32.xlu0 %v1592
    %v1748 = vpop.xlane.xlu0 %1747
    %1749 = vadd.xlane.f32.xlu0 %v1593
    %v1750 = vpop.xlane.xlu0 %1749
    %1751 = vadd.xlane.f32.xlu0 %v1594
    %v1752 = vpop.xlane.xlu0 %1751
    %1753 = vadd.xlane.f32.xlu0 %v1595
    %v1754 = vpop.xlane.xlu0 %1753
    %1755 = vadd.xlane.f32.xlu0 %v1596
    %v1756 = vpop.xlane.xlu0 %1755
    %1757 = vadd.xlane.f32.xlu0 %v1597
    %v1758 = vpop.xlane.xlu0 %1757
    %1759 = vadd.xlane.f32.xlu0 %v1598
    %v1760 = vpop.xlane.xlu0 %1759
    %1761 = vadd.xlane.f32.xlu0 %v1599
    %v1762 = vpop.xlane.xlu0 %1761
    %1763 = vadd.xlane.f32.xlu0 %v1600
    %v1764 = vpop.xlane.xlu0 %1763
    %1765 = vadd.xlane.f32.xlu0 %v1601
    %v1766 = vpop.xlane.xlu0 %1765
    %1767 = vadd.xlane.f32.xlu0 %v1602
    %v1768 = vpop.xlane.xlu0 %1767
    %1769 = vadd.xlane.f32.xlu0 %v1603
    %v1770 = vpop.xlane.xlu0 %1769
    %1771 = vadd.xlane.f32.xlu0 %v1604
    %v1772 = vpop.xlane.xlu0 %1771
    %1773 = vadd.xlane.f32.xlu0 %v1605
    %v1774 = vpop.xlane.xlu0 %1773
    %1775 = vadd.xlane.f32.xlu0 %v1606
    %v1776 = vpop.xlane.xlu0 %1775
    %1777 = vadd.xlane.f32.xlu0 %v1607
    %v1778 = vpop.xlane.xlu0 %1777
    %1779 = vadd.xlane.f32.xlu0 %v1608
    %v1780 = vpop.xlane.xlu0 %1779
    %1781 = vadd.xlane.f32.xlu0 %v1609
    %v1782 = vpop.xlane.xlu0 %1781
    %1783 = vadd.xlane.f32.xlu0 %v1610
    %v1784 = vpop.xlane.xlu0 %1783
    %1785 = vadd.xlane.f32.xlu0 %v1611
    %v1786 = vpop.xlane.xlu0 %1785
    %1787 = vadd.xlane.f32.xlu0 %v1612
    %v1788 = vpop.xlane.xlu0 %1787
    %1789 = vadd.xlane.f32.xlu0 %v1613
    %v1790 = vpop.xlane.xlu0 %1789
    %1791 = vadd.xlane.f32.xlu0 %v1614
    %v1792 = vpop.xlane.xlu0 %1791
    %1793 = vadd.xlane.f32.xlu0 %v1615
    %v1794 = vpop.xlane.xlu0 %1793
    %1795 = vadd.xlane.f32.xlu0 %v1616
    %v1796 = vpop.xlane.xlu0 %1795
    %1797 = vadd.xlane.f32.xlu0 %v1617
    %v1798 = vpop.xlane.xlu0 %1797
    %1799 = vadd.xlane.f32.xlu0 %v1618
    %v1800 = vpop.xlane.xlu0 %1799
    %1801 = vadd.xlane.f32.xlu0 %v1619
    %v1802 = vpop.xlane.xlu0 %1801
    %1803 = vadd.xlane.f32.xlu0 %v1620
    %v1804 = vpop.xlane.xlu0 %1803
    %1805 = vadd.xlane.f32.xlu0 %v1621
    %v1806 = vpop.xlane.xlu0 %1805
    %1807 = vadd.xlane.f32.xlu0 %v1622
    %v1808 = vpop.xlane.xlu0 %1807
    %1809 = vadd.xlane.f32.xlu0 %v1623
    %v1810 = vpop.xlane.xlu0 %1809
    %1811 = vadd.xlane.f32.xlu0 %v1624
    %v1812 = vpop.xlane.xlu0 %1811
    %1813 = vadd.xlane.f32.xlu0 %v1625
    %v1814 = vpop.xlane.xlu0 %1813
    %1815 = vadd.xlane.f32.xlu0 %v1626
    %v1816 = vpop.xlane.xlu0 %1815
    %1817 = vadd.xlane.f32.xlu0 %v1627
    %v1818 = vpop.xlane.xlu0 %1817
    %1819 = vadd.xlane.f32.xlu0 %v1628
    %v1820 = vpop.xlane.xlu0 %1819
    %1821 = vadd.xlane.f32.xlu0 %v1629
    %v1822 = vpop.xlane.xlu0 %1821
    %1823 = vadd.xlane.f32.xlu0 %v1630
    %v1824 = vpop.xlane.xlu0 %1823
    %1825 = vadd.xlane.f32.xlu0 %v1631
    %v1826 = vpop.xlane.xlu0 %1825
    %1827 = vadd.xlane.f32.xlu0 %v1632
    %v1828 = vpop.xlane.xlu0 %1827
    %1829 = vadd.xlane.f32.xlu0 %v1633
    %v1830 = vpop.xlane.xlu0 %1829
    %1831 = vadd.xlane.f32.xlu0 %v1634
    %v1832 = vpop.xlane.xlu0 %1831
    %1833 = vadd.xlane.f32.xlu0 %v1635
    %v1834 = vpop.xlane.xlu0 %1833
    %1835 = vadd.xlane.f32.xlu0 %v1636
    %v1836 = vpop.xlane.xlu0 %1835
    %1837 = vadd.xlane.f32.xlu0 %v1637
    %v1838 = vpop.xlane.xlu0 %1837
    %1839 = vadd.xlane.f32.xlu0 %v1638
    %v1840 = vpop.xlane.xlu0 %1839
    %1841 = vadd.xlane.f32.xlu0 %v1639
    %v1842 = vpop.xlane.xlu0 %1841
    %1843 = vadd.xlane.f32.xlu0 %v1640
    %v1844 = vpop.xlane.xlu0 %1843
    %1845 = vadd.xlane.f32.xlu0 %v1641
    %v1846 = vpop.xlane.xlu0 %1845
    %1847 = vadd.xlane.f32.xlu0 %v1642
    %v1848 = vpop.xlane.xlu0 %1847
    %1849 = vadd.xlane.f32.xlu0 %v1643
    %v1850 = vpop.xlane.xlu0 %1849
    %1851 = vadd.xlane.f32.xlu0 %v1644
    %v1852 = vpop.xlane.xlu0 %1851
    %1853 = vadd.xlane.f32.xlu0 %v1645
    %v1854 = vpop.xlane.xlu0 %1853
    %1855 = vadd.xlane.f32.xlu0 %v1646
    %v1856 = vpop.xlane.xlu0 %1855
    %1857 = vadd.xlane.f32.xlu0 %v1647
    %v1858 = vpop.xlane.xlu0 %1857
    %1859 = vadd.xlane.f32.xlu0 %v1648
    %v1860 = vpop.xlane.xlu0 %1859
    %1861 = vadd.xlane.f32.xlu0 %v1649
    %v1862 = vpop.xlane.xlu0 %1861
    %1863 = vadd.xlane.f32.xlu0 %v1650
    %v1864 = vpop.xlane.xlu0 %1863
    %1865 = vadd.xlane.f32.xlu0 %v1651
    %v1866 = vpop.xlane.xlu0 %1865
    %1867 = vadd.xlane.f32.xlu0 %v1652
    %v1868 = vpop.xlane.xlu0 %1867
    %1869 = vadd.xlane.f32.xlu0 %v1653
    %v1870 = vpop.xlane.xlu0 %1869
    %1871 = vadd.xlane.f32.xlu0 %v1654
    %v1872 = vpop.xlane.xlu0 %1871
    %1873 = vadd.xlane.f32.xlu0 %v1655
    %v1874 = vpop.xlane.xlu0 %1873
    %1875 = vadd.xlane.f32.xlu0 %v1656
    %v1876 = vpop.xlane.xlu0 %1875
    %1877 = vadd.xlane.f32.xlu0 %v1657
    %v1878 = vpop.xlane.xlu0 %1877
    %1879 = vadd.xlane.f32.xlu0 %v1658
    %v1880 = vpop.xlane.xlu0 %1879
    %1881 = vadd.xlane.f32.xlu0 %v1659
    %v1882 = vpop.xlane.xlu0 %1881
    %1883 = vadd.xlane.f32.xlu0 %v1660
    %v1884 = vpop.xlane.xlu0 %1883
    %1885 = vadd.xlane.f32.xlu0 %v1661
    %v1886 = vpop.xlane.xlu0 %1885
    %1887 = vadd.xlane.f32.xlu0 %v1662
    %v1888 = vpop.xlane.xlu0 %1887
    %1889 = vadd.xlane.f32.xlu0 %v1663
    %v1890 = vpop.xlane.xlu0 %1889
    %1891 = vadd.xlane.f32.xlu0 %v1664
    %v1892 = vpop.xlane.xlu0 %1891
    %1893 = vadd.xlane.f32.xlu0 %v1665
    %v1894 = vpop.xlane.xlu0 %1893
    %1895 = vadd.xlane.f32.xlu0 %v1666
    %v1896 = vpop.xlane.xlu0 %1895
    %1897 = vadd.xlane.f32.xlu0 %v1667
    %v1898 = vpop.xlane.xlu0 %1897
    %1899 = vadd.xlane.f32.xlu0 %v1668
    %v1900 = vpop.xlane.xlu0 %1899
    %1901 = vadd.xlane.f32.xlu0 %v1669
    %v1902 = vpop.xlane.xlu0 %1901
    %1903 = vadd.xlane.f32.xlu0 %v1670
    %v1904 = vpop.xlane.xlu0 %1903
    %1905 = vadd.xlane.f32.xlu0 %v1671
    %v1906 = vpop.xlane.xlu0 %1905
    %1907 = vadd.xlane.f32.xlu0 %v1672
    %v1908 = vpop.xlane.xlu0 %1907
    %1909 = vadd.xlane.f32.xlu0 %v1673
    %v1910 = vpop.xlane.xlu0 %1909
    %1911 = vadd.xlane.f32.xlu0 %v1674
    %v1912 = vpop.xlane.xlu0 %1911
    %1913 = vadd.xlane.f32.xlu0 %v1675
    %v1914 = vpop.xlane.xlu0 %1913
    %1915 = vadd.xlane.f32.xlu0 %v1676
    %v1916 = vpop.xlane.xlu0 %1915
    %1917 = vadd.xlane.f32.xlu0 %v1677
    %v1918 = vpop.xlane.xlu0 %1917
    %1919 = vadd.xlane.f32.xlu0 %v1678
    %v1920 = vpop.xlane.xlu0 %1919
    %1921 = vadd.xlane.f32.xlu0 %v1679
    %v1922 = vpop.xlane.xlu0 %1921
    %1923 = vadd.xlane.f32.xlu0 %v1680
    %v1924 = vpop.xlane.xlu0 %1923
    %1925 = vadd.xlane.f32.xlu0 %v1681
    %v1926 = vpop.xlane.xlu0 %1925
    %1927 = vadd.xlane.f32.xlu0 %v1682
    %v1928 = vpop.xlane.xlu0 %1927
    %1929 = vadd.xlane.f32.xlu0 %v1683
    %v1930 = vpop.xlane.xlu0 %1929
    %1931 = vadd.xlane.f32.xlu0 %v1684
    %v1932 = vpop.xlane.xlu0 %1931
    %1933 = vadd.xlane.f32.xlu0 %v1685
    %v1934 = vpop.xlane.xlu0 %1933
    %1935 = vadd.xlane.f32.xlu0 %v1686
    %v1936 = vpop.xlane.xlu0 %1935
    %1937 = vadd.xlane.f32.xlu0 %v1687
    %v1938 = vpop.xlane.xlu0 %1937
    %1939 = vadd.xlane.f32.xlu0 %v1688
    %v1940 = vpop.xlane.xlu0 %1939
    %1941 = vadd.xlane.f32.xlu0 %v1689
    %v1942 = vpop.xlane.xlu0 %1941
    %1943 = vadd.xlane.f32.xlu0 %v1690
    %v1944 = vpop.xlane.xlu0 %1943
    %1945 = vadd.xlane.f32.xlu0 %v1691
    %v1946 = vpop.xlane.xlu0 %1945
    %1947 = vadd.xlane.f32.xlu0 %v1692
    %v1948 = vpop.xlane.xlu0 %1947
    %v1949 = vld [vmem:[#allocation2] sm:$0xff]
    %v2078 = vperm.slane %v1286, %v86
    %v2079 = vadd.s32 %v86, 4294967288
    %v2080 = vperm.slane %v1288, %v2079
    %vm2081 = vcmask 130112
    %v2082 = vsel %vm2081, %v2080, %v2078
    %v2083 = vadd.s32 %v86, 4294967280
    %v2084 = vperm.slane %v1290, %v2083
    %vm2085 = vcmask 195712
    %v2086 = vsel %vm2085, %v2084, %v2082
    %v2087 = vadd.s32 %v86, 4294967272
    %v2088 = vperm.slane %v1292, %v2087
    %vm2089 = vcmask 261312
    %v2090 = vsel %vm2089, %v2088, %v2086
    %v2091 = vadd.s32 %v86, 4294967264
    %v2092 = vperm.slane %v1294, %v2091
    %vm2093 = vcmask 326912
    %v2094 = vsel %vm2093, %v2092, %v2090
    %v2095 = vadd.s32 %v86, 4294967256
    %v2096 = vperm.slane %v1296, %v2095
    %vm2097 = vcmask 392512
    %v2098 = vsel %vm2097, %v2096, %v2094
    %v2099 = vadd.s32 %v86, 4294967248
    %v2100 = vperm.slane %v1298, %v2099
    %vm2101 = vcmask 458112
    %v2102 = vsel %vm2101, %v2100, %v2098
    %v2103 = vadd.s32 %v86, 4294967240
    %v2104 = vperm.slane %v1300, %v2103
    %vm2105 = vcmask 523712
    %v2106 = vsel %vm2105, %v2104, %v2102
    %v2107 = vadd.s32 %v86, 4294967232
    %v2108 = vperm.slane %v1302, %v2107
    %vm2109 = vcmask 589312
    %v2110 = vsel %vm2109, %v2108, %v2106
    %v2111 = vadd.s32 %v86, 4294967224
    %v2112 = vperm.slane %v1304, %v2111
    %vm2113 = vcmask 654912
    %v2114 = vsel %vm2113, %v2112, %v2110
    %v2115 = vadd.s32 %v86, 4294967216
    %v2116 = vperm.slane %v1306, %v2115
    %vm2117 = vcmask 720512
    %v2118 = vsel %vm2117, %v2116, %v2114
    %v2119 = vadd.s32 %v86, 4294967208
    %v2120 = vperm.slane %v1308, %v2119
    %vm2121 = vcmask 786112
    %v2122 = vsel %vm2121, %v2120, %v2118
    %v2123 = vadd.s32 %v86, 4294967200
    %v2124 = vperm.slane %v1310, %v2123
    %vm2125 = vcmask 851712
    %v2126 = vsel %vm2125, %v2124, %v2122
    %v2127 = vadd.s32 %v86, 4294967192
    %v2128 = vperm.slane %v1312, %v2127
    %vm2129 = vcmask 917312
    %v2130 = vsel %vm2129, %v2128, %v2126
    %v2131 = vadd.s32 %v86, 4294967184
    %v2132 = vperm.slane %v1314, %v2131
    %vm2133 = vcmask 982912
    %v2134 = vsel %vm2133, %v2132, %v2130
    %v2135 = vadd.s32 %v86, 4294967176
    %v2136 = vperm.slane %v1316, %v2135
    %vm2137 = vcmask 1048512
    %v2138 = vsel %vm2137, %v2136, %v2134
    %v2139 = vperm.slane %v1318, %v86
    %v2140 = vperm.slane %v1320, %v2079
    %v2141 = vsel %vm2081, %v2140, %v2139
    %v2142 = vperm.slane %v1322, %v2083
    %v2143 = vsel %vm2085, %v2142, %v2141
    %v2144 = vperm.slane %v1324, %v2087
    %v2145 = vsel %vm2089, %v2144, %v2143
    %v2146 = vperm.slane %v1326, %v2091
    %v2147 = vsel %vm2093, %v2146, %v2145
    %v2148 = vperm.slane %v1328, %v2095
    %v2149 = vsel %vm2097, %v2148, %v2147
    %v2150 = vperm.slane %v1330, %v2099
    %v2151 = vsel %vm2101, %v2150, %v2149
    %v2152 = vperm.slane %v1332, %v2103
    %v2153 = vsel %vm2105, %v2152, %v2151
    %v2154 = vperm.slane %v1334, %v2107
    %v2155 = vsel %vm2109, %v2154, %v2153
    %v2156 = vperm.slane %v1336, %v2111
    %v2157 = vsel %vm2113, %v2156, %v2155
    %v2158 = vperm.slane %v1338, %v2115
    %v2159 = vsel %vm2117, %v2158, %v2157
    %v2160 = vperm.slane %v1340, %v2119
    %v2161 = vsel %vm2121, %v2160, %v2159
    %v2162 = vperm.slane %v1342, %v2123
    %v2163 = vsel %vm2125, %v2162, %v2161
    %v2164 = vperm.slane %v1344, %v2127
    %v2165 = vsel %vm2129, %v2164, %v2163
    %v2166 = vperm.slane %v1346, %v2131
    %v2167 = vsel %vm2133, %v2166, %v2165
    %v2168 = vperm.slane %v1348, %v2135
    %v2169 = vsel %vm2137, %v2168, %v2167
    %v2170 = vperm.slane %v1350, %v86
    %v2171 = vperm.slane %v1352, %v2079
    %v2172 = vsel %vm2081, %v2171, %v2170
    %v2173 = vperm.slane %v1354, %v2083
    %v2174 = vsel %vm2085, %v2173, %v2172
    %v2175 = vperm.slane %v1356, %v2087
    %v2176 = vsel %vm2089, %v2175, %v2174
    %v2177 = vperm.slane %v1358, %v2091
    %v2178 = vsel %vm2093, %v2177, %v2176
    %v2179 = vperm.slane %v1360, %v2095
    %v2180 = vsel %vm2097, %v2179, %v2178
    %v2181 = vperm.slane %v1362, %v2099
    %v2182 = vsel %vm2101, %v2181, %v2180
    %v2183 = vperm.slane %v1364, %v2103
    %v2184 = vsel %vm2105, %v2183, %v2182
    %v2185 = vperm.slane %v1366, %v2107
    %v2186 = vsel %vm2109, %v2185, %v2184
    %v2187 = vperm.slane %v1368, %v2111
    %v2188 = vsel %vm2113, %v2187, %v2186
    %v2189 = vperm.slane %v1370, %v2115
    %v2190 = vsel %vm2117, %v2189, %v2188
    %v2191 = vperm.slane %v1372, %v2119
    %v2192 = vsel %vm2121, %v2191, %v2190
    %v2193 = vperm.slane %v1374, %v2123
    %v2194 = vsel %vm2125, %v2193, %v2192
    %v2195 = vperm.slane %v1376, %v2127
    %v2196 = vsel %vm2129, %v2195, %v2194
    %v2197 = vperm.slane %v1378, %v2131
    %v2198 = vsel %vm2133, %v2197, %v2196
    %v2199 = vperm.slane %v1380, %v2135
    %v2200 = vsel %vm2137, %v2199, %v2198
    %v2201 = vperm.slane %v1382, %v86
    %v2202 = vperm.slane %v1384, %v2079
    %v2203 = vsel %vm2081, %v2202, %v2201
    %v2204 = vperm.slane %v1386, %v2083
    %v2205 = vsel %vm2085, %v2204, %v2203
    %v2206 = vperm.slane %v1388, %v2087
    %v2207 = vsel %vm2089, %v2206, %v2205
    %v2208 = vperm.slane %v1390, %v2091
    %v2209 = vsel %vm2093, %v2208, %v2207
    %v2210 = vperm.slane %v1392, %v2095
    %v2211 = vsel %vm2097, %v2210, %v2209
    %v2212 = vperm.slane %v1394, %v2099
    %v2213 = vsel %vm2101, %v2212, %v2211
    %v2214 = vperm.slane %v1396, %v2103
    %v2215 = vsel %vm2105, %v2214, %v2213
    %v2216 = vperm.slane %v1398, %v2107
    %v2217 = vsel %vm2109, %v2216, %v2215
    %v2218 = vperm.slane %v1400, %v2111
    %v2219 = vsel %vm2113, %v2218, %v2217
    %v2220 = vperm.slane %v1402, %v2115
    %v2221 = vsel %vm2117, %v2220, %v2219
    %v2222 = vperm.slane %v1404, %v2119
    %v2223 = vsel %vm2121, %v2222, %v2221
    %v2224 = vperm.slane %v1406, %v2123
    %v2225 = vsel %vm2125, %v2224, %v2223
    %v2226 = vperm.slane %v1408, %v2127
    %v2227 = vsel %vm2129, %v2226, %v2225
    %v2228 = vperm.slane %v1410, %v2131
    %v2229 = vsel %vm2133, %v2228, %v2227
    %v2230 = vperm.slane %v1412, %v2135
    %v2231 = vsel %vm2137, %v2230, %v2229
    %v2232 = vperm.slane %v1414, %v86
    %v2233 = vperm.slane %v1416, %v2079
    %v2234 = vsel %vm2081, %v2233, %v2232
    %v2235 = vperm.slane %v1418, %v2083
    %v2236 = vsel %vm2085, %v2235, %v2234
    %v2237 = vperm.slane %v1420, %v2087
    %v2238 = vsel %vm2089, %v2237, %v2236
    %v2239 = vperm.slane %v1422, %v2091
    %v2240 = vsel %vm2093, %v2239, %v2238
    %v2241 = vperm.slane %v1424, %v2095
    %v2242 = vsel %vm2097, %v2241, %v2240
    %v2243 = vperm.slane %v1426, %v2099
    %v2244 = vsel %vm2101, %v2243, %v2242
    %v2245 = vperm.slane %v1428, %v2103
    %v2246 = vsel %vm2105, %v2245, %v2244
    %v2247 = vperm.slane %v1430, %v2107
    %v2248 = vsel %vm2109, %v2247, %v2246
    %v2249 = vperm.slane %v1432, %v2111
    %v2250 = vsel %vm2113, %v2249, %v2248
    %v2251 = vperm.slane %v1434, %v2115
    %v2252 = vsel %vm2117, %v2251, %v2250
    %v2253 = vperm.slane %v1436, %v2119
    %v2254 = vsel %vm2121, %v2253, %v2252
    %v2255 = vperm.slane %v1438, %v2123
    %v2256 = vsel %vm2125, %v2255, %v2254
    %v2257 = vperm.slane %v1440, %v2127
    %v2258 = vsel %vm2129, %v2257, %v2256
    %v2259 = vperm.slane %v1442, %v2131
    %v2260 = vsel %vm2133, %v2259, %v2258
    %v2261 = vperm.slane %v1444, %v2135
    %v2262 = vsel %vm2137, %v2261, %v2260
    %v2263 = vperm.slane %v1446, %v86
    %v2264 = vperm.slane %v1448, %v2079
    %v2265 = vsel %vm2081, %v2264, %v2263
    %v2266 = vperm.slane %v1450, %v2083
    %v2267 = vsel %vm2085, %v2266, %v2265
    %v2268 = vperm.slane %v1452, %v2087
    %v2269 = vsel %vm2089, %v2268, %v2267
    %v2270 = vperm.slane %v1454, %v2091
    %v2271 = vsel %vm2093, %v2270, %v2269
    %v2272 = vperm.slane %v1456, %v2095
    %v2273 = vsel %vm2097, %v2272, %v2271
    %v2274 = vperm.slane %v1458, %v2099
    %v2275 = vsel %vm2101, %v2274, %v2273
    %v2276 = vperm.slane %v1460, %v2103
    %v2277 = vsel %vm2105, %v2276, %v2275
    %v2278 = vperm.slane %v1462, %v2107
    %v2279 = vsel %vm2109, %v2278, %v2277
    %v2280 = vperm.slane %v1464, %v2111
    %v2281 = vsel %vm2113, %v2280, %v2279
    %v2282 = vperm.slane %v1466, %v2115
    %v2283 = vsel %vm2117, %v2282, %v2281
    %v2284 = vperm.slane %v1468, %v2119
    %v2285 = vsel %vm2121, %v2284, %v2283
    %v2286 = vperm.slane %v1470, %v2123
    %v2287 = vsel %vm2125, %v2286, %v2285
    %v2288 = vperm.slane %v1472, %v2127
    %v2289 = vsel %vm2129, %v2288, %v2287
    %v2290 = vperm.slane %v1474, %v2131
    %v2291 = vsel %vm2133, %v2290, %v2289
    %v2292 = vperm.slane %v1476, %v2135
    %v2293 = vsel %vm2137, %v2292, %v2291
    %v2294 = vperm.slane %v1478, %v86
    %v2295 = vperm.slane %v1480, %v2079
    %v2296 = vsel %vm2081, %v2295, %v2294
    %v2297 = vperm.slane %v1482, %v2083
    %v2298 = vsel %vm2085, %v2297, %v2296
    %v2299 = vperm.slane %v1484, %v2087
    %v2300 = vsel %vm2089, %v2299, %v2298
    %v2301 = vperm.slane %v1486, %v2091
    %v2302 = vsel %vm2093, %v2301, %v2300
    %v2303 = vperm.slane %v1488, %v2095
    %v2304 = vsel %vm2097, %v2303, %v2302
    %v2305 = vperm.slane %v1490, %v2099
    %v2306 = vsel %vm2101, %v2305, %v2304
    %v2307 = vperm.slane %v1492, %v2103
    %v2308 = vsel %vm2105, %v2307, %v2306
    %v2309 = vperm.slane %v1494, %v2107
    %v2310 = vsel %vm2109, %v2309, %v2308
    %v2311 = vperm.slane %v1496, %v2111
    %v2312 = vsel %vm2113, %v2311, %v2310
    %v2313 = vperm.slane %v1498, %v2115
    %v2314 = vsel %vm2117, %v2313, %v2312
    %v2315 = vperm.slane %v1500, %v2119
    %v2316 = vsel %vm2121, %v2315, %v2314
    %v2317 = vperm.slane %v1502, %v2123
    %v2318 = vsel %vm2125, %v2317, %v2316
    %v2319 = vperm.slane %v1504, %v2127
    %v2320 = vsel %vm2129, %v2319, %v2318
    %v2321 = vperm.slane %v1506, %v2131
    %v2322 = vsel %vm2133, %v2321, %v2320
    %v2323 = vperm.slane %v1508, %v2135
    %v2324 = vsel %vm2137, %v2323, %v2322
    %v2325 = vperm.slane %v1510, %v86
    %v2326 = vperm.slane %v1512, %v2079
    %v2327 = vsel %vm2081, %v2326, %v2325
    %v2328 = vperm.slane %v1514, %v2083
    %v2329 = vsel %vm2085, %v2328, %v2327
    %v2330 = vperm.slane %v1516, %v2087
    %v2331 = vsel %vm2089, %v2330, %v2329
    %v2332 = vperm.slane %v1518, %v2091
    %v2333 = vsel %vm2093, %v2332, %v2331
    %v2334 = vperm.slane %v1520, %v2095
    %v2335 = vsel %vm2097, %v2334, %v2333
    %v2336 = vperm.slane %v1522, %v2099
    %v2337 = vsel %vm2101, %v2336, %v2335
    %v2338 = vperm.slane %v1524, %v2103
    %v2339 = vsel %vm2105, %v2338, %v2337
    %v2340 = vperm.slane %v1526, %v2107
    %v2341 = vsel %vm2109, %v2340, %v2339
    %v2342 = vperm.slane %v1528, %v2111
    %v2343 = vsel %vm2113, %v2342, %v2341
    %v2344 = vperm.slane %v1530, %v2115
    %v2345 = vsel %vm2117, %v2344, %v2343
    %v2346 = vperm.slane %v1532, %v2119
    %v2347 = vsel %vm2121, %v2346, %v2345
    %v2348 = vperm.slane %v1534, %v2123
    %v2349 = vsel %vm2125, %v2348, %v2347
    %v2350 = vperm.slane %v1536, %v2127
    %v2351 = vsel %vm2129, %v2350, %v2349
    %v2352 = vperm.slane %v1538, %v2131
    %v2353 = vsel %vm2133, %v2352, %v2351
    %v2354 = vperm.slane %v1540, %v2135
    %v2355 = vsel %vm2137, %v2354, %v2353
    %vm2356 = vcmask 1041409
    %v2357 = vsel %vm2356, %v2169, %v2138
    %vm2358 = vcmask 1042434
    %v2359 = vsel %vm2358, %v2200, %v2357
    %vm2360 = vcmask 1043459
    %v2361 = vsel %vm2360, %v2231, %v2359
    %vm2362 = vcmask 1044484
    %v2363 = vsel %vm2362, %v2262, %v2361
    %vm2364 = vcmask 1045509
    %v2365 = vsel %vm2364, %v2293, %v2363
    %vm2366 = vcmask 1046534
    %v2367 = vsel %vm2366, %v2324, %v2365
    %vm2368 = vcmask 1047559
    %v2369 = vsel %vm2368, %v2355, %v2367
    %v2371 = vadd.f32 %v1949, %v2369
    %2372 = vst [vmem:[#allocation2] sm:$0xff] %v2371
    %v2373 = vld [vmem:[#allocation3] sm:$0xff]
    %v2502 = vperm.slane %v1694, %v86
    %v2503 = vperm.slane %v1696, %v2079
    %v2504 = vsel %vm2081, %v2503, %v2502
    %v2505 = vperm.slane %v1698, %v2083
    %v2506 = vsel %vm2085, %v2505, %v2504
    %v2507 = vperm.slane %v1700, %v2087
    %v2508 = vsel %vm2089, %v2507, %v2506
    %v2509 = vperm.slane %v1702, %v2091
    %v2510 = vsel %vm2093, %v2509, %v2508
    %v2511 = vperm.slane %v1704, %v2095
    %v2512 = vsel %vm2097, %v2511, %v2510
    %v2513 = vperm.slane %v1706, %v2099
    %v2514 = vsel %vm2101, %v2513, %v2512
    %v2515 = vperm.slane %v1708, %v2103
    %v2516 = vsel %vm2105, %v2515, %v2514
    %v2517 = vperm.slane %v1710, %v2107
    %v2518 = vsel %vm2109, %v2517, %v2516
    %v2519 = vperm.slane %v1712, %v2111
    %v2520 = vsel %vm2113, %v2519, %v2518
    %v2521 = vperm.slane %v1714, %v2115
    %v2522 = vsel %vm2117, %v2521, %v2520
    %v2523 = vperm.slane %v1716, %v2119
    %v2524 = vsel %vm2121, %v2523, %v2522
    %v2525 = vperm.slane %v1718, %v2123
    %v2526 = vsel %vm2125, %v2525, %v2524
    %v2527 = vperm.slane %v1720, %v2127
    %v2528 = vsel %vm2129, %v2527, %v2526
    %v2529 = vperm.slane %v1722, %v2131
    %v2530 = vsel %vm2133, %v2529, %v2528
    %v2531 = vperm.slane %v1724, %v2135
    %v2532 = vsel %vm2137, %v2531, %v2530
    %v2533 = vperm.slane %v1726, %v86
    %v2534 = vperm.slane %v1728, %v2079
    %v2535 = vsel %vm2081, %v2534, %v2533
    %v2536 = vperm.slane %v1730, %v2083
    %v2537 = vsel %vm2085, %v2536, %v2535
    %v2538 = vperm.slane %v1732, %v2087
    %v2539 = vsel %vm2089, %v2538, %v2537
    %v2540 = vperm.slane %v1734, %v2091
    %v2541 = vsel %vm2093, %v2540, %v2539
    %v2542 = vperm.slane %v1736, %v2095
    %v2543 = vsel %vm2097, %v2542, %v2541
    %v2544 = vperm.slane %v1738, %v2099
    %v2545 = vsel %vm2101, %v2544, %v2543
    %v2546 = vperm.slane %v1740, %v2103
    %v2547 = vsel %vm2105, %v2546, %v2545
    %v2548 = vperm.slane %v1742, %v2107
    %v2549 = vsel %vm2109, %v2548, %v2547
    %v2550 = vperm.slane %v1744, %v2111
    %v2551 = vsel %vm2113, %v2550, %v2549
    %v2552 = vperm.slane %v1746, %v2115
    %v2553 = vsel %vm2117, %v2552, %v2551
    %v2554 = vperm.slane %v1748, %v2119
    %v2555 = vsel %vm2121, %v2554, %v2553
    %v2556 = vperm.slane %v1750, %v2123
    %v2557 = vsel %vm2125, %v2556, %v2555
    %v2558 = vperm.slane %v1752, %v2127
    %v2559 = vsel %vm2129, %v2558, %v2557
    %v2560 = vperm.slane %v1754, %v2131
    %v2561 = vsel %vm2133, %v2560, %v2559
    %v2562 = vperm.slane %v1756, %v2135
    %v2563 = vsel %vm2137, %v2562, %v2561
    %v2564 = vperm.slane %v1758, %v86
    %v2565 = vperm.slane %v1760, %v2079
    %v2566 = vsel %vm2081, %v2565, %v2564
    %v2567 = vperm.slane %v1762, %v2083
    %v2568 = vsel %vm2085, %v2567, %v2566
    %v2569 = vperm.slane %v1764, %v2087
    %v2570 = vsel %vm2089, %v2569, %v2568
    %v2571 = vperm.slane %v1766, %v2091
    %v2572 = vsel %vm2093, %v2571, %v2570
    %v2573 = vperm.slane %v1768, %v2095
    %v2574 = vsel %vm2097, %v2573, %v2572
    %v2575 = vperm.slane %v1770, %v2099
    %v2576 = vsel %vm2101, %v2575, %v2574
    %v2577 = vperm.slane %v1772, %v2103
    %v2578 = vsel %vm2105, %v2577, %v2576
    %v2579 = vperm.slane %v1774, %v2107
    %v2580 = vsel %vm2109, %v2579, %v2578
    %v2581 = vperm.slane %v1776, %v2111
    %v2582 = vsel %vm2113, %v2581, %v2580
    %v2583 = vperm.slane %v1778, %v2115
    %v2584 = vsel %vm2117, %v2583, %v2582
    %v2585 = vperm.slane %v1780, %v2119
    %v2586 = vsel %vm2121, %v2585, %v2584
    %v2587 = vperm.slane %v1782, %v2123
    %v2588 = vsel %vm2125, %v2587, %v2586
    %v2589 = vperm.slane %v1784, %v2127
    %v2590 = vsel %vm2129, %v2589, %v2588
    %v2591 = vperm.slane %v1786, %v2131
    %v2592 = vsel %vm2133, %v2591, %v2590
    %v2593 = vperm.slane %v1788, %v2135
    %v2594 = vsel %vm2137, %v2593, %v2592
    %v2595 = vperm.slane %v1790, %v86
    %v2596 = vperm.slane %v1792, %v2079
    %v2597 = vsel %vm2081, %v2596, %v2595
    %v2598 = vperm.slane %v1794, %v2083
    %v2599 = vsel %vm2085, %v2598, %v2597
    %v2600 = vperm.slane %v1796, %v2087
    %v2601 = vsel %vm2089, %v2600, %v2599
    %v2602 = vperm.slane %v1798, %v2091
    %v2603 = vsel %vm2093, %v2602, %v2601
    %v2604 = vperm.slane %v1800, %v2095
    %v2605 = vsel %vm2097, %v2604, %v2603
    %v2606 = vperm.slane %v1802, %v2099
    %v2607 = vsel %vm2101, %v2606, %v2605
    %v2608 = vperm.slane %v1804, %v2103
    %v2609 = vsel %vm2105, %v2608, %v2607
    %v2610 = vperm.slane %v1806, %v2107
    %v2611 = vsel %vm2109, %v2610, %v2609
    %v2612 = vperm.slane %v1808, %v2111
    %v2613 = vsel %vm2113, %v2612, %v2611
    %v2614 = vperm.slane %v1810, %v2115
    %v2615 = vsel %vm2117, %v2614, %v2613
    %v2616 = vperm.slane %v1812, %v2119
    %v2617 = vsel %vm2121, %v2616, %v2615
    %v2618 = vperm.slane %v1814, %v2123
    %v2619 = vsel %vm2125, %v2618, %v2617
    %v2620 = vperm.slane %v1816, %v2127
    %v2621 = vsel %vm2129, %v2620, %v2619
    %v2622 = vperm.slane %v1818, %v2131
    %v2623 = vsel %vm2133, %v2622, %v2621
    %v2624 = vperm.slane %v1820, %v2135
    %v2625 = vsel %vm2137, %v2624, %v2623
    %v2626 = vperm.slane %v1822, %v86
    %v2627 = vperm.slane %v1824, %v2079
    %v2628 = vsel %vm2081, %v2627, %v2626
    %v2629 = vperm.slane %v1826, %v2083
    %v2630 = vsel %vm2085, %v2629, %v2628
    %v2631 = vperm.slane %v1828, %v2087
    %v2632 = vsel %vm2089, %v2631, %v2630
    %v2633 = vperm.slane %v1830, %v2091
    %v2634 = vsel %vm2093, %v2633, %v2632
    %v2635 = vperm.slane %v1832, %v2095
    %v2636 = vsel %vm2097, %v2635, %v2634
    %v2637 = vperm.slane %v1834, %v2099
    %v2638 = vsel %vm2101, %v2637, %v2636
    %v2639 = vperm.slane %v1836, %v2103
    %v2640 = vsel %vm2105, %v2639, %v2638
    %v2641 = vperm.slane %v1838, %v2107
    %v2642 = vsel %vm2109, %v2641, %v2640
    %v2643 = vperm.slane %v1840, %v2111
    %v2644 = vsel %vm2113, %v2643, %v2642
    %v2645 = vperm.slane %v1842, %v2115
    %v2646 = vsel %vm2117, %v2645, %v2644
    %v2647 = vperm.slane %v1844, %v2119
    %v2648 = vsel %vm2121, %v2647, %v2646
    %v2649 = vperm.slane %v1846, %v2123
    %v2650 = vsel %vm2125, %v2649, %v2648
    %v2651 = vperm.slane %v1848, %v2127
    %v2652 = vsel %vm2129, %v2651, %v2650
    %v2653 = vperm.slane %v1850, %v2131
    %v2654 = vsel %vm2133, %v2653, %v2652
    %v2655 = vperm.slane %v1852, %v2135
    %v2656 = vsel %vm2137, %v2655, %v2654
    %v2657 = vperm.slane %v1854, %v86
    %v2658 = vperm.slane %v1856, %v2079
    %v2659 = vsel %vm2081, %v2658, %v2657
    %v2660 = vperm.slane %v1858, %v2083
    %v2661 = vsel %vm2085, %v2660, %v2659
    %v2662 = vperm.slane %v1860, %v2087
    %v2663 = vsel %vm2089, %v2662, %v2661
    %v2664 = vperm.slane %v1862, %v2091
    %v2665 = vsel %vm2093, %v2664, %v2663
    %v2666 = vperm.slane %v1864, %v2095
    %v2667 = vsel %vm2097, %v2666, %v2665
    %v2668 = vperm.slane %v1866, %v2099
    %v2669 = vsel %vm2101, %v2668, %v2667
    %v2670 = vperm.slane %v1868, %v2103
    %v2671 = vsel %vm2105, %v2670, %v2669
    %v2672 = vperm.slane %v1870, %v2107
    %v2673 = vsel %vm2109, %v2672, %v2671
    %v2674 = vperm.slane %v1872, %v2111
    %v2675 = vsel %vm2113, %v2674, %v2673
    %v2676 = vperm.slane %v1874, %v2115
    %v2677 = vsel %vm2117, %v2676, %v2675
    %v2678 = vperm.slane %v1876, %v2119
    %v2679 = vsel %vm2121, %v2678, %v2677
    %v2680 = vperm.slane %v1878, %v2123
    %v2681 = vsel %vm2125, %v2680, %v2679
    %v2682 = vperm.slane %v1880, %v2127
    %v2683 = vsel %vm2129, %v2682, %v2681
    %v2684 = vperm.slane %v1882, %v2131
    %v2685 = vsel %vm2133, %v2684, %v2683
    %v2686 = vperm.slane %v1884, %v2135
    %v2687 = vsel %vm2137, %v2686, %v2685
    %v2688 = vperm.slane %v1886, %v86
    %v2689 = vperm.slane %v1888, %v2079
    %v2690 = vsel %vm2081, %v2689, %v2688
    %v2691 = vperm.slane %v1890, %v2083
    %v2692 = vsel %vm2085, %v2691, %v2690
    %v2693 = vperm.slane %v1892, %v2087
    %v2694 = vsel %vm2089, %v2693, %v2692
    %v2695 = vperm.slane %v1894, %v2091
    %v2696 = vsel %vm2093, %v2695, %v2694
    %v2697 = vperm.slane %v1896, %v2095
    %v2698 = vsel %vm2097, %v2697, %v2696
    %v2699 = vperm.slane %v1898, %v2099
    %v2700 = vsel %vm2101, %v2699, %v2698
    %v2701 = vperm.slane %v1900, %v2103
    %v2702 = vsel %vm2105, %v2701, %v2700
    %v2703 = vperm.slane %v1902, %v2107
    %v2704 = vsel %vm2109, %v2703, %v2702
    %v2705 = vperm.slane %v1904, %v2111
    %v2706 = vsel %vm2113, %v2705, %v2704
    %v2707 = vperm.slane %v1906, %v2115
    %v2708 = vsel %vm2117, %v2707, %v2706
    %v2709 = vperm.slane %v1908, %v2119
    %v2710 = vsel %vm2121, %v2709, %v2708
    %v2711 = vperm.slane %v1910, %v2123
    %v2712 = vsel %vm2125, %v2711, %v2710
    %v2713 = vperm.slane %v1912, %v2127
    %v2714 = vsel %vm2129, %v2713, %v2712
    %v2715 = vperm.slane %v1914, %v2131
    %v2716 = vsel %vm2133, %v2715, %v2714
    %v2717 = vperm.slane %v1916, %v2135
    %v2718 = vsel %vm2137, %v2717, %v2716
    %v2719 = vperm.slane %v1918, %v86
    %v2720 = vperm.slane %v1920, %v2079
    %v2721 = vsel %vm2081, %v2720, %v2719
    %v2722 = vperm.slane %v1922, %v2083
    %v2723 = vsel %vm2085, %v2722, %v2721
    %v2724 = vperm.slane %v1924, %v2087
    %v2725 = vsel %vm2089, %v2724, %v2723
    %v2726 = vperm.slane %v1926, %v2091
    %v2727 = vsel %vm2093, %v2726, %v2725
    %v2728 = vperm.slane %v1928, %v2095
    %v2729 = vsel %vm2097, %v2728, %v2727
    %v2730 = vperm.slane %v1930, %v2099
    %v2731 = vsel %vm2101, %v2730, %v2729
    %v2732 = vperm.slane %v1932, %v2103
    %v2733 = vsel %vm2105, %v2732, %v2731
    %v2734 = vperm.slane %v1934, %v2107
    %v2735 = vsel %vm2109, %v2734, %v2733
    %v2736 = vperm.slane %v1936, %v2111
    %v2737 = vsel %vm2113, %v2736, %v2735
    %v2738 = vperm.slane %v1938, %v2115
    %v2739 = vsel %vm2117, %v2738, %v2737
    %v2740 = vperm.slane %v1940, %v2119
    %v2741 = vsel %vm2121, %v2740, %v2739
    %v2742 = vperm.slane %v1942, %v2123
    %v2743 = vsel %vm2125, %v2742, %v2741
    %v2744 = vperm.slane %v1944, %v2127
    %v2745 = vsel %vm2129, %v2744, %v2743
    %v2746 = vperm.slane %v1946, %v2131
    %v2747 = vsel %vm2133, %v2746, %v2745
    %v2748 = vperm.slane %v1948, %v2135
    %v2749 = vsel %vm2137, %v2748, %v2747
    %v2750 = vsel %vm2356, %v2563, %v2532
    %v2751 = vsel %vm2358, %v2594, %v2750
    %v2752 = vsel %vm2360, %v2625, %v2751
    %v2753 = vsel %vm2362, %v2656, %v2752
    %v2754 = vsel %vm2364, %v2687, %v2753
    %v2755 = vsel %vm2366, %v2718, %v2754
    %v2756 = vsel %vm2368, %v2749, %v2755
    %v2758 = vadd.f32 %v2373, %v2756
    %2759 = vst [vmem:[#allocation3] sm:$0xff] %v2758
    // Predicated region
    $region38: #{tpu_custom_call.1} parent=1 // pred_check
      %p2760 = pneg %p76
    $region39: #{tpu_custom_call.1} parent=1 // pred_check_branch
      %2762 = sbr.rel (%p2760) target = $region41
    $region40: #{tpu_custom_call.1} parent=1 // pred_region
      %v2763 = vld [vmem:[#allocation2] sm:$0xff]
      %v2764 = vld [vmem:[#allocation3] sm:$0xff]
      %v2765 = vld [vmem:[#allocation4] sm:$0xff]
      %2766 = vst [vmem:[#allocation13] sm:$0xff] %v2763
      %v2767 = vmul.f32 %v2765, %v2763
      %v2768 = vsub.f32 %v2767, %v2764
      %v2769 = vsub.f32 %v2763, %v2768
      %2770 = vst [vmem:[#allocation12] sm:$0xff] %v2769
    $region41: #{tpu_custom_call.1} parent=1 // pred_fallthru
      _
    // Predicated region
    $region42: #{tpu_custom_call.1} parent=1 // pred_check
      _
    $region43: #{tpu_custom_call.1} parent=1 // pred_check_branch
      %2772 = sbr.rel (0) target = $region45
    $region44: #{tpu_custom_call.1} parent=1 // pred_region
      %2774 = vsyncadd [#allocation6], 0
      %s2776 = sshll.u32 [#allocation12], 4
      %s2777 = int_to_ptr.vmem [resolvable:$true] %s2776
      %s2778 = sshll.u32 %s4, 4
      %s2779 = int_to_ptr.hbm [resolvable:$true] %s2778
      %2781 = dma.vmem_to_hbm [thread:$0]  %s2777, 128, %s2779, [#allocation6]
    $region45: #{tpu_custom_call.1} parent=1 // pred_fallthru
      _
    // Predicated region
    $region46: #{tpu_custom_call.1} parent=1 // pred_check
      _
    $region47: #{tpu_custom_call.1} parent=1 // pred_check_branch
      %2783 = sbr.rel (0) target = $region49
    $region48: #{tpu_custom_call.1} parent=1 // pred_region
      %2785 = vsyncadd [#allocation14], 0
      %s2787 = sshll.u32 [#allocation13], 4
      %s2788 = int_to_ptr.vmem [resolvable:$true] %s2787
      %s2789 = sshll.u32 %s5, 4
      %s2790 = int_to_ptr.hbm [resolvable:$true] %s2789
      %2792 = dma.vmem_to_hbm [thread:$0]  %s2788, 128, %s2790, [#allocation14]
    $region49: #{tpu_custom_call.1} parent=1 // pred_fallthru
      _
    // Predicated region
    $region50: #{tpu_custom_call.1} parent=1 // pred_check
      _
    $region51: #{tpu_custom_call.1} parent=1 // pred_check_branch
      %2794 = sbr.rel (0) target = $region53
    $region52: #{tpu_custom_call.1} parent=1 // pred_region
      %2796 = dma.done [#allocation6], 128
    $region53: #{tpu_custom_call.1} parent=1 // pred_fallthru
      _
    // Predicated region
    $region54: #{tpu_custom_call.1} parent=1 // pred_check
      _
    $region55: #{tpu_custom_call.1} parent=1 // pred_check_branch
      %2798 = sbr.rel (0) target = $region57
    $region56: #{tpu_custom_call.1} parent=1 // pred_region
      %2800 = dma.done [#allocation14], 128
    $region57: #{tpu_custom_call.1} parent=1 // pred_fallthru
      _
    %2801 = vsyncpa [#allocation5], 1
    %2802 = vsyncpa [#allocation8], 1
    %2803 = vsyncpa [#allocation11], 1
    %2804 = vsyncpa [#allocation6], 1
    %2805 = vsyncpa [#allocation14], 1

</llo_original>
